<compile_context>
chip_gen: v5e
topology: v5e:2x2
jax: 0.10.0
libtpu: 0.0.40
codegen_flags: <defaults>
</compile_context>

<pallas_src>
import functools
import math

import jax
import jax.numpy as jnp
from jax.experimental import pallas as pl
from jax.experimental.pallas import tpu as pltpu

# ---- small, module-consistent config ----
T = 8            # temporal / sequence length
B = 2            # batch
C = 32           # d_model
NHEAD = 4
HEAD_DIM = C // NHEAD
FFN = 64         # dim_feedforward
NUM_LAYERS = 2
EPS = 1e-5       # LayerNorm eps (PyTorch default)


def _layernorm(x, gamma, beta):
    mu = jnp.mean(x, axis=-1, keepdims=True)
    var = jnp.mean((x - mu) ** 2, axis=-1, keepdims=True)
    return (x - mu) * jax.lax.rsqrt(var + EPS) * gamma + beta


def _encoder_stack_kernel(x_ref, pos_ref,
                          wqk_ref, wv_ref, wo_ref, w1_ref, w2_ref,
                          bqk_ref, b1_ref, cvec_ref, fnorm_ref,
                          o_ref,
                          *, num_layers, nhead, head_dim, d_model, batch,
                          apply_final_norm):
    x = x_ref[...]                # (T*B, C) -- rows ordered (t0,b0),(t0,b1),...
    pos = pos_ref[...]            # (T*B, C)
    n_rows = x.shape[0]
    scale = 1.0 / math.sqrt(head_dim)

    # Batch mask: row r belongs to batch (r % B).  Computed once, reused by
    # every layer / head.  Masked scores underflow to exactly 0 after exp,
    # so this is equivalent to per-batch attention.
    row_b = jax.lax.broadcasted_iota(jnp.int32, (n_rows, n_rows), 0) % batch
    col_b = jax.lax.broadcasted_iota(jnp.int32, (n_rows, n_rows), 1) % batch
    same_batch = row_b == col_b
    neg = jnp.float32(-1e30)

    for l in range(num_layers):            # static unroll over layers
        wqk = wqk_ref[l]                   # (C, 2C)
        wv = wv_ref[l]                     # (C, C)
        wo = wo_ref[l]                     # (C, C)
        w1 = w1_ref[l]                     # (C, FFN)
        w2 = w2_ref[l]                     # (FFN, C)
        bqk = bqk_ref[l]                   # (1, 2C)
        b1 = b1_ref[l]                     # (1, FFN)
        cv = cvec_ref[l]                   # (7, C): bv, bo, b2, g1, be1, g2, be2
        bv, bo, b2 = cv[0:1], cv[1:2], cv[2:3]
        g1, be1, g2, be2 = cv[3:4], cv[4:5], cv[5:6], cv[6:7]

        # ---- self-attention (q = k = x + pos, v = x) ----
        qk_in = x + pos
        qk = jnp.dot(qk_in, wqk, preferred_element_type=jnp.float32) + bqk   # (R, 2C)
        v = jnp.dot(x, wv, preferred_element_type=jnp.float32) + bv          # (R, C)
        q = qk[:, :d_model] * scale        # fold 1/sqrt(d) into q
        k = qk[:, d_model:]

        heads = []
        for h in range(nhead):             # static unroll over heads
            lo = h * head_dim
            hi = lo + head_dim
            qh = q[:, lo:hi]
            kh = k[:, lo:hi]
            vh = v[:, lo:hi]
            # s = qh @ kh^T (contract last dims; no explicit transpose)
            s = jax.lax.dot_general(qh, kh, (((1,), (1,)), ((), ())),
                                    preferred_element_type=jnp.float32)
            s = jnp.where(same_batch, s, neg)
            s = s - jnp.max(s, axis=-1, keepdims=True)
            p = jnp.exp(s)
            p = p * pl.reciprocal(jnp.sum(p, axis=-1, keepdims=True), approx=True)
            heads.append(jnp.dot(p, vh, preferred_element_type=jnp.float32))
        attn = jnp.concatenate(heads, axis=-1)                               # (R, C)
        attn = jnp.dot(attn, wo, preferred_element_type=jnp.float32) + bo

        # ---- residual + LayerNorm 1 (post-norm) ----
        y = _layernorm(x + attn, g1, be1)

        # ---- feed-forward ----
        h1 = jnp.maximum(
            jnp.dot(y, w1, preferred_element_type=jnp.float32) + b1, 0.0)
        h2 = jnp.dot(h1, w2, preferred_element_type=jnp.float32) + b2

        # ---- residual + LayerNorm 2 ----
        x = _layernorm(y + h2, g2, be2)

    if apply_final_norm:
        fn = fnorm_ref[...]                # (2, C): gamma, beta
        x = _layernorm(x, fn[0:1], fn[1:2])

    o_ref[...] = x


def _full_spec(shape):
    n = len(shape)
    return pl.BlockSpec(shape, lambda i, _n=n: (0,) * _n)


def pack_params(layer_params):
    """Stack per-layer parameter dicts into the fused-kernel layout."""
    wqk = jnp.stack([jnp.concatenate([p['wq'], p['wk']], axis=1) for p in layer_params])
    wv = jnp.stack([p['wv'] for p in layer_params])
    wo = jnp.stack([p['wo'] for p in layer_params])
    w1 = jnp.stack([p['w1'] for p in layer_params])
    w2 = jnp.stack([p['w2'] for p in layer_params])
    bqk = jnp.stack([jnp.concatenate([p['bq'], p['bk']], axis=1) for p in layer_params])
    b1 = jnp.stack([p['b1'] for p in layer_params])
    cvec = jnp.stack([
        jnp.concatenate([p['bv'], p['bo'], p['b2'],
                         p['g1'], p['be1'], p['g2'], p['be2']], axis=0)
        for p in layer_params])
    return wqk, wv, wo, w1, w2, bqk, b1, cvec


def get_reference_points(temporal_dim_len, batch):
    ref = jnp.linspace(0.5, temporal_dim_len - 0.5, temporal_dim_len, dtype=jnp.float32)
    ref = ref[None, :] / temporal_dim_len                               # (1, T)
    return jnp.broadcast_to(ref, (batch, temporal_dim_len))[..., None]  # (B, T, 1)


def transformer_encoder(src, pos, layer_params, norm_params=None):
    """src, pos: (T, B, C) float32 (PyTorch seq-first). Returns (T, B, C)."""
    Tn, Bn, Cn = src.shape
    # computed for parity with the reference forward; the standard layer does not use it
    _reference_points = get_reference_points(Tn, Bn)

    # Free, copy-less row-major reshape: (T, B, C) -> (T*B, C).  No transposes.
    x2 = src.reshape(Tn * Bn, Cn)
    p2 = pos.reshape(Tn * Bn, Cn)

    wqk, wv, wo, w1, w2, bqk, b1, cvec = pack_params(layer_params)
    apply_final_norm = norm_params is not None
    if apply_final_norm:
        fnorm = jnp.concatenate([norm_params[0], norm_params[1]], axis=0)   # (2, C)
    else:
        fnorm = jnp.zeros((2, Cn), jnp.float32)   # dummy, statically unused

    kernel = functools.partial(
        _encoder_stack_kernel,
        num_layers=len(layer_params), nhead=NHEAD, head_dim=HEAD_DIM,
        d_model=Cn, batch=Bn, apply_final_norm=apply_final_norm)

    operands = (x2, p2, wqk, wv, wo, w1, w2, bqk, b1, cvec, fnorm)
    in_specs = [_full_spec(op.shape) for op in operands]

    out2 = pl.pallas_call(
        kernel,
        out_shape=jax.ShapeDtypeStruct((Tn * Bn, Cn), jnp.float32),
        grid_spec=pltpu.PrefetchScalarGridSpec(
            num_scalar_prefetch=0,
            grid=(1,),                      # whole problem in one grid step
            in_specs=in_specs,
            out_specs=pl.BlockSpec((Tn * Bn, Cn), lambda i: (0, 0)),
        ),
        compiler_params=pltpu.CompilerParams(dimension_semantics=("arbitrary",)),
    )(*operands)

    return out2.reshape(Tn, Bn, Cn)


def init_layer_params(key):
    ks = jax.random.split(key, 6)

    def w(kk, shape):
        fan_in = shape[0]
        return jax.random.normal(kk, shape, jnp.float32) / jnp.sqrt(float(fan_in))

    return dict(
        wq=w(ks[0], (C, C)), bq=jnp.zeros((1, C), jnp.float32),
        wk=w(ks[1], (C, C)), bk=jnp.zeros((1, C), jnp.float32),
        wv=w(ks[2], (C, C)), bv=jnp.zeros((1, C), jnp.float32),
        wo=w(ks[3], (C, C)), bo=jnp.zeros((1, C), jnp.float32),
        w1=w(ks[4], (C, FFN)), b1=jnp.zeros((1, FFN), jnp.float32),
        w2=w(ks[5], (FFN, C)), b2=jnp.zeros((1, C), jnp.float32),
        g1=jnp.ones((1, C), jnp.float32), be1=jnp.zeros((1, C), jnp.float32),
        g2=jnp.ones((1, C), jnp.float32), be2=jnp.zeros((1, C), jnp.float32),
    )


if __name__ == "__main__":
    key = jax.random.PRNGKey(0)
    k_src, k_pos, *k_layers = jax.random.split(key, 2 + NUM_LAYERS)

    src = jax.random.normal(k_src, (T, B, C), jnp.float32)   # (seq, batch, d_model)
    pos = jax.random.normal(k_pos, (T, B, C), jnp.float32)

    layer_params = [init_layer_params(k) for k in k_layers]
    norm_params = (jnp.ones((1, C), jnp.float32), jnp.zeros((1, C), jnp.float32))

    out = transformer_encoder(src, pos, layer_params, norm_params)
    out = jax.block_until_ready(out)
    assert out.shape == (T, B, C)
    assert bool(jnp.all(jnp.isfinite(out)))
    print("KERNEL_OK")
</pallas_src>

<mosaic_0001>
module attributes {stable_mosaic.version = 11 : i64} {
  func.func @_encoder_stack_kernel(%arg0: i32, %arg1: memref<16x32xf32, #tpu.memory_space<vmem>>, %arg2: memref<16x32xf32, #tpu.memory_space<vmem>>, %arg3: memref<2x32x64xf32, #tpu.memory_space<vmem>>, %arg4: memref<2x32x32xf32, #tpu.memory_space<vmem>>, %arg5: memref<2x32x32xf32, #tpu.memory_space<vmem>>, %arg6: memref<2x32x64xf32, #tpu.memory_space<vmem>>, %arg7: memref<2x64x32xf32, #tpu.memory_space<vmem>>, %arg8: memref<2x1x64xf32, #tpu.memory_space<vmem>>, %arg9: memref<2x1x64xf32, #tpu.memory_space<vmem>>, %arg10: memref<2x7x32xf32, #tpu.memory_space<vmem>>, %arg11: memref<2x32xf32, #tpu.memory_space<vmem>>, %arg12: memref<16x32xf32, #tpu.memory_space<vmem>>) attributes {dimension_semantics = [#tpu.dimension_semantics<arbitrary>], iteration_bounds = array<i64: 1>, scalar_prefetch = 0 : i64, scratch_operands = 0 : i64, tpu.core_type = #tpu.core_type<tc>, window_params = [{pipeline_mode = #tpu.pipeline_mode<synchronous>, transform_indices = @transform_0, window_bounds = array<i64: 16, 32>}, {pipeline_mode = #tpu.pipeline_mode<synchronous>, transform_indices = @transform_1, window_bounds = array<i64: 16, 32>}, {pipeline_mode = #tpu.pipeline_mode<synchronous>, transform_indices = @transform_2, window_bounds = array<i64: 2, 32, 64>}, {pipeline_mode = #tpu.pipeline_mode<synchronous>, transform_indices = @transform_3, window_bounds = array<i64: 2, 32, 32>}, {pipeline_mode = #tpu.pipeline_mode<synchronous>, transform_indices = @transform_4, window_bounds = array<i64: 2, 32, 32>}, {pipeline_mode = #tpu.pipeline_mode<synchronous>, transform_indices = @transform_5, window_bounds = array<i64: 2, 32, 64>}, {pipeline_mode = #tpu.pipeline_mode<synchronous>, transform_indices = @transform_6, window_bounds = array<i64: 2, 64, 32>}, {pipeline_mode = #tpu.pipeline_mode<synchronous>, transform_indices = @transform_7, window_bounds = array<i64: 2, 1, 64>}, {pipeline_mode = #tpu.pipeline_mode<synchronous>, transform_indices = @transform_8, window_bounds = array<i64: 2, 1, 64>}, {pipeline_mode = #tpu.pipeline_mode<synchronous>, transform_indices = @transform_9, window_bounds = array<i64: 2, 7, 32>}, {pipeline_mode = #tpu.pipeline_mode<synchronous>, transform_indices = @transform_10, window_bounds = array<i64: 2, 32>}, {pipeline_mode = #tpu.pipeline_mode<synchronous>, transform_indices = @transform_11, window_bounds = array<i64: 16, 32>}]} {
    %c0 = arith.constant 0 : index
    %c0_0 = arith.constant 0 : index
    %0 = vector.load %arg1[%c0, %c0_0] : memref<16x32xf32, #tpu.memory_space<vmem>>, vector<16x32xf32>
    %c0_1 = arith.constant 0 : index
    %c0_2 = arith.constant 0 : index
    %1 = vector.load %arg2[%c0_1, %c0_2] : memref<16x32xf32, #tpu.memory_space<vmem>>, vector<16x32xf32>
    %2 = tpu.iota {dimensions = array<i32: 0>} : vector<16x16xi32>
    %c2_i32 = arith.constant 2 : i32
    %c0_i32 = arith.constant 0 : i32
    %3 = arith.cmpi eq, %c2_i32, %c0_i32 : i32
    %c1_i32 = arith.constant 1 : i32
    %4 = arith.select %3, %c1_i32, %c2_i32 : i32
    %5 = vector.broadcast %4 : i32 to vector<16x16xi32>
    %6 = arith.remsi %2, %5 : vector<16x16xi32>
    %c0_i32_3 = arith.constant 0 : i32
    %7 = vector.broadcast %c0_i32_3 : i32 to vector<16x16xi32>
    %8 = arith.cmpi ne, %6, %7 : vector<16x16xi32>
    %c0_i32_4 = arith.constant 0 : i32
    %9 = vector.broadcast %c0_i32_4 : i32 to vector<16x16xi32>
    %10 = arith.cmpi slt, %6, %9 : vector<16x16xi32>
    %c0_i32_5 = arith.constant 0 : i32
    %11 = arith.cmpi slt, %4, %c0_i32_5 : i32
    %12 = vector.broadcast %11 : i1 to vector<16x16xi1>
    %13 = vector.broadcast %12 : vector<16x16xi1> to vector<16x16xi1>
    %14 = arith.xori %10, %13 : vector<16x16xi1>
    %15 = arith.andi %14, %8 : vector<16x16xi1>
    %16 = vector.broadcast %4 : i32 to vector<16x16xi32>
    %17 = arith.addi %6, %16 : vector<16x16xi32>
    %18 = arith.select %15, %17, %6 : vector<16x16xi1>, vector<16x16xi32>
    %19 = tpu.iota {dimensions = array<i32: 1>} : vector<16x16xi32>
    %c2_i32_6 = arith.constant 2 : i32
    %c0_i32_7 = arith.constant 0 : i32
    %20 = arith.cmpi eq, %c2_i32_6, %c0_i32_7 : i32
    %c1_i32_8 = arith.constant 1 : i32
    %21 = arith.select %20, %c1_i32_8, %c2_i32_6 : i32
    %22 = vector.broadcast %21 : i32 to vector<16x16xi32>
    %23 = arith.remsi %19, %22 : vector<16x16xi32>
    %c0_i32_9 = arith.constant 0 : i32
    %24 = vector.broadcast %c0_i32_9 : i32 to vector<16x16xi32>
    %25 = arith.cmpi ne, %23, %24 : vector<16x16xi32>
    %c0_i32_10 = arith.constant 0 : i32
    %26 = vector.broadcast %c0_i32_10 : i32 to vector<16x16xi32>
    %27 = arith.cmpi slt, %23, %26 : vector<16x16xi32>
    %c0_i32_11 = arith.constant 0 : i32
    %28 = arith.cmpi slt, %21, %c0_i32_11 : i32
    %29 = vector.broadcast %28 : i1 to vector<16x16xi1>
    %30 = vector.broadcast %29 : vector<16x16xi1> to vector<16x16xi1>
    %31 = arith.xori %27, %30 : vector<16x16xi1>
    %32 = arith.andi %31, %25 : vector<16x16xi1>
    %33 = vector.broadcast %21 : i32 to vector<16x16xi32>
    %34 = arith.addi %23, %33 : vector<16x16xi32>
    %35 = arith.select %32, %34, %23 : vector<16x16xi1>, vector<16x16xi32>
    %36 = arith.cmpi eq, %18, %35 : vector<16x16xi32>
    %c0_12 = arith.constant 0 : index
    %c0_13 = arith.constant 0 : index
    %c0_14 = arith.constant 0 : index
    %37 = vector.load %arg3[%c0_12, %c0_13, %c0_14] : memref<2x32x64xf32, #tpu.memory_space<vmem>>, vector<1x32x64xf32>
    %38 = vector.shape_cast %37 : vector<1x32x64xf32> to vector<32x64xf32>
    %c0_15 = arith.constant 0 : index
    %c0_16 = arith.constant 0 : index
    %c0_17 = arith.constant 0 : index
    %39 = vector.load %arg4[%c0_15, %c0_16, %c0_17] : memref<2x32x32xf32, #tpu.memory_space<vmem>>, vector<1x32x32xf32>
    %40 = vector.shape_cast %39 : vector<1x32x32xf32> to vector<32x32xf32>
    %c0_18 = arith.constant 0 : index
    %c0_19 = arith.constant 0 : index
    %c0_20 = arith.constant 0 : index
    %41 = vector.load %arg5[%c0_18, %c0_19, %c0_20] : memref<2x32x32xf32, #tpu.memory_space<vmem>>, vector<1x32x32xf32>
    %42 = vector.shape_cast %41 : vector<1x32x32xf32> to vector<32x32xf32>
    %c0_21 = arith.constant 0 : index
    %c0_22 = arith.constant 0 : index
    %c0_23 = arith.constant 0 : index
    %43 = vector.load %arg6[%c0_21, %c0_22, %c0_23] : memref<2x32x64xf32, #tpu.memory_space<vmem>>, vector<1x32x64xf32>
    %44 = vector.shape_cast %43 : vector<1x32x64xf32> to vector<32x64xf32>
    %c0_24 = arith.constant 0 : index
    %c0_25 = arith.constant 0 : index
    %c0_26 = arith.constant 0 : index
    %45 = vector.load %arg7[%c0_24, %c0_25, %c0_26] : memref<2x64x32xf32, #tpu.memory_space<vmem>>, vector<1x64x32xf32>
    %46 = vector.shape_cast %45 : vector<1x64x32xf32> to vector<64x32xf32>
    %c0_27 = arith.constant 0 : index
    %c0_28 = arith.constant 0 : index
    %c0_29 = arith.constant 0 : index
    %47 = vector.load %arg8[%c0_27, %c0_28, %c0_29] : memref<2x1x64xf32, #tpu.memory_space<vmem>>, vector<1x1x64xf32>
    %48 = vector.shape_cast %47 : vector<1x1x64xf32> to vector<1x64xf32>
    %c0_30 = arith.constant 0 : index
    %c0_31 = arith.constant 0 : index
    %c0_32 = arith.constant 0 : index
    %49 = vector.load %arg9[%c0_30, %c0_31, %c0_32] : memref<2x1x64xf32, #tpu.memory_space<vmem>>, vector<1x1x64xf32>
    %50 = vector.shape_cast %49 : vector<1x1x64xf32> to vector<1x64xf32>
    %c0_33 = arith.constant 0 : index
    %c0_34 = arith.constant 0 : index
    %c0_35 = arith.constant 0 : index
    %51 = vector.load %arg10[%c0_33, %c0_34, %c0_35] : memref<2x7x32xf32, #tpu.memory_space<vmem>>, vector<1x7x32xf32>
    %52 = vector.shape_cast %51 : vector<1x7x32xf32> to vector<7x32xf32>
    %53 = vector.extract_strided_slice %52 {offsets = [0, 0], sizes = [1, 32], strides = [1, 1]} : vector<7x32xf32> to vector<1x32xf32>
    %54 = vector.extract_strided_slice %52 {offsets = [1, 0], sizes = [1, 32], strides = [1, 1]} : vector<7x32xf32> to vector<1x32xf32>
    %55 = vector.extract_strided_slice %52 {offsets = [2, 0], sizes = [1, 32], strides = [1, 1]} : vector<7x32xf32> to vector<1x32xf32>
    %56 = vector.extract_strided_slice %52 {offsets = [3, 0], sizes = [1, 32], strides = [1, 1]} : vector<7x32xf32> to vector<1x32xf32>
    %57 = vector.extract_strided_slice %52 {offsets = [4, 0], sizes = [1, 32], strides = [1, 1]} : vector<7x32xf32> to vector<1x32xf32>
    %58 = vector.extract_strided_slice %52 {offsets = [5, 0], sizes = [1, 32], strides = [1, 1]} : vector<7x32xf32> to vector<1x32xf32>
    %59 = vector.extract_strided_slice %52 {offsets = [6, 0], sizes = [1, 32], strides = [1, 1]} : vector<7x32xf32> to vector<1x32xf32>
    %60 = arith.addf %0, %1 : vector<16x32xf32>
    %cst = arith.constant dense<0.000000e+00> : vector<16x64xf32>
    %61 = tpu.matmul %60, %38, %cst {dimension_numbers = #tpu.dot_dimension_numbers<[1], [0], [0], [1], [0, 0, 1, 1], [], []>} : vector<16x32xf32>, vector<32x64xf32>, vector<16x64xf32> -> vector<16x64xf32>
    %62 = vector.broadcast %48 : vector<1x64xf32> to vector<16x64xf32>
    %63 = arith.addf %61, %62 : vector<16x64xf32>
    %cst_36 = arith.constant dense<0.000000e+00> : vector<16x32xf32>
    %64 = tpu.matmul %0, %40, %cst_36 {dimension_numbers = #tpu.dot_dimension_numbers<[1], [0], [0], [1], [0, 0, 1, 1], [], []>} : vector<16x32xf32>, vector<32x32xf32>, vector<16x32xf32> -> vector<16x32xf32>
    %65 = vector.broadcast %53 : vector<1x32xf32> to vector<16x32xf32>
    %66 = arith.addf %64, %65 : vector<16x32xf32>
    %67 = vector.extract_strided_slice %63 {offsets = [0, 0], sizes = [16, 32], strides = [1, 1]} : vector<16x64xf32> to vector<16x32xf32>
    %cst_37 = arith.constant 0.353553385 : f32
    %68 = vector.broadcast %cst_37 : f32 to vector<16x32xf32>
    %69 = arith.mulf %67, %68 : vector<16x32xf32>
    %70 = vector.extract_strided_slice %63 {offsets = [0, 32], sizes = [16, 32], strides = [1, 1]} : vector<16x64xf32> to vector<16x32xf32>
    %71 = vector.extract_strided_slice %69 {offsets = [0, 0], sizes = [16, 8], strides = [1, 1]} : vector<16x32xf32> to vector<16x8xf32>
    %72 = vector.extract_strided_slice %70 {offsets = [0, 0], sizes = [16, 8], strides = [1, 1]} : vector<16x32xf32> to vector<16x8xf32>
    %73 = vector.extract_strided_slice %66 {offsets = [0, 0], sizes = [16, 8], strides = [1, 1]} : vector<16x32xf32> to vector<16x8xf32>
    %cst_38 = arith.constant dense<0.000000e+00> : vector<16x16xf32>
    %74 = tpu.matmul %71, %72, %cst_38 {dimension_numbers = #tpu.dot_dimension_numbers<[1], [1], [0], [0], [0, 0, 1, 0], [], []>} : vector<16x8xf32>, vector<16x8xf32>, vector<16x16xf32> -> vector<16x16xf32>
    %cst_39 = arith.constant -1.000000e+30 : f32
    %75 = vector.broadcast %cst_39 : f32 to vector<16x16xf32>
    %76 = arith.select %36, %74, %75 : vector<16x16xi1>, vector<16x16xf32>
    %cst_40 = arith.constant dense<0xFF800000> : vector<16xf32>
    %77 = vector.multi_reduction <maximumf>, %76, %cst_40 [1] : vector<16x16xf32> to vector<16xf32>
    %78 = vector.shape_cast %77 : vector<16xf32> to vector<16x1xf32>
    %79 = vector.broadcast %78 : vector<16x1xf32> to vector<16x16xf32>
    %80 = arith.subf %76, %79 : vector<16x16xf32>
    %81 = math.exp %80 : vector<16x16xf32>
    %cst_41 = arith.constant dense<0.000000e+00> : vector<16xf32>
    %82 = vector.multi_reduction <add>, %81, %cst_41 [1] : vector<16x16xf32> to vector<16xf32>
    %83 = vector.shape_cast %82 : vector<16xf32> to vector<16x1xf32>
    %84 = tpu.reciprocal %83 {approx = true} : vector<16x1xf32> -> vector<16x1xf32>
    %85 = vector.broadcast %84 : vector<16x1xf32> to vector<16x16xf32>
    %86 = arith.mulf %81, %85 : vector<16x16xf32>
    %cst_42 = arith.constant dense<0.000000e+00> : vector<16x8xf32>
    %87 = tpu.matmul %86, %73, %cst_42 {dimension_numbers = #tpu.dot_dimension_numbers<[1], [0], [0], [1], [0, 0, 1, 1], [], []>} : vector<16x16xf32>, vector<16x8xf32>, vector<16x8xf32> -> vector<16x8xf32>
    %88 = vector.extract_strided_slice %69 {offsets = [0, 8], sizes = [16, 8], strides = [1, 1]} : vector<16x32xf32> to vector<16x8xf32>
    %89 = vector.extract_strided_slice %70 {offsets = [0, 8], sizes = [16, 8], strides = [1, 1]} : vector<16x32xf32> to vector<16x8xf32>
    %90 = vector.extract_strided_slice %66 {offsets = [0, 8], sizes = [16, 8], strides = [1, 1]} : vector<16x32xf32> to vector<16x8xf32>
    %cst_43 = arith.constant dense<0.000000e+00> : vector<16x16xf32>
    %91 = tpu.matmul %88, %89, %cst_43 {dimension_numbers = #tpu.dot_dimension_numbers<[1], [1], [0], [0], [0, 0, 1, 0], [], []>} : vector<16x8xf32>, vector<16x8xf32>, vector<16x16xf32> -> vector<16x16xf32>
    %cst_44 = arith.constant -1.000000e+30 : f32
    %92 = vector.broadcast %cst_44 : f32 to vector<16x16xf32>
    %93 = arith.select %36, %91, %92 : vector<16x16xi1>, vector<16x16xf32>
    %cst_45 = arith.constant dense<0xFF800000> : vector<16xf32>
    %94 = vector.multi_reduction <maximumf>, %93, %cst_45 [1] : vector<16x16xf32> to vector<16xf32>
    %95 = vector.shape_cast %94 : vector<16xf32> to vector<16x1xf32>
    %96 = vector.broadcast %95 : vector<16x1xf32> to vector<16x16xf32>
    %97 = arith.subf %93, %96 : vector<16x16xf32>
    %98 = math.exp %97 : vector<16x16xf32>
    %cst_46 = arith.constant dense<0.000000e+00> : vector<16xf32>
    %99 = vector.multi_reduction <add>, %98, %cst_46 [1] : vector<16x16xf32> to vector<16xf32>
    %100 = vector.shape_cast %99 : vector<16xf32> to vector<16x1xf32>
    %101 = tpu.reciprocal %100 {approx = true} : vector<16x1xf32> -> vector<16x1xf32>
    %102 = vector.broadcast %101 : vector<16x1xf32> to vector<16x16xf32>
    %103 = arith.mulf %98, %102 : vector<16x16xf32>
    %cst_47 = arith.constant dense<0.000000e+00> : vector<16x8xf32>
    %104 = tpu.matmul %103, %90, %cst_47 {dimension_numbers = #tpu.dot_dimension_numbers<[1], [0], [0], [1], [0, 0, 1, 1], [], []>} : vector<16x16xf32>, vector<16x8xf32>, vector<16x8xf32> -> vector<16x8xf32>
    %105 = vector.extract_strided_slice %69 {offsets = [0, 16], sizes = [16, 8], strides = [1, 1]} : vector<16x32xf32> to vector<16x8xf32>
    %106 = vector.extract_strided_slice %70 {offsets = [0, 16], sizes = [16, 8], strides = [1, 1]} : vector<16x32xf32> to vector<16x8xf32>
    %107 = vector.extract_strided_slice %66 {offsets = [0, 16], sizes = [16, 8], strides = [1, 1]} : vector<16x32xf32> to vector<16x8xf32>
    %cst_48 = arith.constant dense<0.000000e+00> : vector<16x16xf32>
    %108 = tpu.matmul %105, %106, %cst_48 {dimension_numbers = #tpu.dot_dimension_numbers<[1], [1], [0], [0], [0, 0, 1, 0], [], []>} : vector<16x8xf32>, vector<16x8xf32>, vector<16x16xf32> -> vector<16x16xf32>
    %cst_49 = arith.constant -1.000000e+30 : f32
    %109 = vector.broadcast %cst_49 : f32 to vector<16x16xf32>
    %110 = arith.select %36, %108, %109 : vector<16x16xi1>, vector<16x16xf32>
    %cst_50 = arith.constant dense<0xFF800000> : vector<16xf32>
    %111 = vector.multi_reduction <maximumf>, %110, %cst_50 [1] : vector<16x16xf32> to vector<16xf32>
    %112 = vector.shape_cast %111 : vector<16xf32> to vector<16x1xf32>
    %113 = vector.broadcast %112 : vector<16x1xf32> to vector<16x16xf32>
    %114 = arith.subf %110, %113 : vector<16x16xf32>
    %115 = math.exp %114 : vector<16x16xf32>
    %cst_51 = arith.constant dense<0.000000e+00> : vector<16xf32>
    %116 = vector.multi_reduction <add>, %115, %cst_51 [1] : vector<16x16xf32> to vector<16xf32>
    %117 = vector.shape_cast %116 : vector<16xf32> to vector<16x1xf32>
    %118 = tpu.reciprocal %117 {approx = true} : vector<16x1xf32> -> vector<16x1xf32>
    %119 = vector.broadcast %118 : vector<16x1xf32> to vector<16x16xf32>
    %120 = arith.mulf %115, %119 : vector<16x16xf32>
    %cst_52 = arith.constant dense<0.000000e+00> : vector<16x8xf32>
    %121 = tpu.matmul %120, %107, %cst_52 {dimension_numbers = #tpu.dot_dimension_numbers<[1], [0], [0], [1], [0, 0, 1, 1], [], []>} : vector<16x16xf32>, vector<16x8xf32>, vector<16x8xf32> -> vector<16x8xf32>
    %122 = vector.extract_strided_slice %69 {offsets = [0, 24], sizes = [16, 8], strides = [1, 1]} : vector<16x32xf32> to vector<16x8xf32>
    %123 = vector.extract_strided_slice %70 {offsets = [0, 24], sizes = [16, 8], strides = [1, 1]} : vector<16x32xf32> to vector<16x8xf32>
    %124 = vector.extract_strided_slice %66 {offsets = [0, 24], sizes = [16, 8], strides = [1, 1]} : vector<16x32xf32> to vector<16x8xf32>
    %cst_53 = arith.constant dense<0.000000e+00> : vector<16x16xf32>
    %125 = tpu.matmul %122, %123, %cst_53 {dimension_numbers = #tpu.dot_dimension_numbers<[1], [1], [0], [0], [0, 0, 1, 0], [], []>} : vector<16x8xf32>, vector<16x8xf32>, vector<16x16xf32> -> vector<16x16xf32>
    %cst_54 = arith.constant -1.000000e+30 : f32
    %126 = vector.broadcast %cst_54 : f32 to vector<16x16xf32>
    %127 = arith.select %36, %125, %126 : vector<16x16xi1>, vector<16x16xf32>
    %cst_55 = arith.constant dense<0xFF800000> : vector<16xf32>
    %128 = vector.multi_reduction <maximumf>, %127, %cst_55 [1] : vector<16x16xf32> to vector<16xf32>
    %129 = vector.shape_cast %128 : vector<16xf32> to vector<16x1xf32>
    %130 = vector.broadcast %129 : vector<16x1xf32> to vector<16x16xf32>
    %131 = arith.subf %127, %130 : vector<16x16xf32>
    %132 = math.exp %131 : vector<16x16xf32>
    %cst_56 = arith.constant dense<0.000000e+00> : vector<16xf32>
    %133 = vector.multi_reduction <add>, %132, %cst_56 [1] : vector<16x16xf32> to vector<16xf32>
    %134 = vector.shape_cast %133 : vector<16xf32> to vector<16x1xf32>
    %135 = tpu.reciprocal %134 {approx = true} : vector<16x1xf32> -> vector<16x1xf32>
    %136 = vector.broadcast %135 : vector<16x1xf32> to vector<16x16xf32>
    %137 = arith.mulf %132, %136 : vector<16x16xf32>
    %cst_57 = arith.constant dense<0.000000e+00> : vector<16x8xf32>
    %138 = tpu.matmul %137, %124, %cst_57 {dimension_numbers = #tpu.dot_dimension_numbers<[1], [0], [0], [1], [0, 0, 1, 1], [], []>} : vector<16x16xf32>, vector<16x8xf32>, vector<16x8xf32> -> vector<16x8xf32>
    %139 = tpu.concatenate %87, %104, %121, %138 in 1 : vector<16x8xf32>, vector<16x8xf32>, vector<16x8xf32>, vector<16x8xf32> -> vector<16x32xf32>
    %cst_58 = arith.constant dense<0.000000e+00> : vector<16x32xf32>
    %140 = tpu.matmul %139, %42, %cst_58 {dimension_numbers = #tpu.dot_dimension_numbers<[1], [0], [0], [1], [0, 0, 1, 1], [], []>} : vector<16x32xf32>, vector<32x32xf32>, vector<16x32xf32> -> vector<16x32xf32>
    %141 = vector.broadcast %54 : vector<1x32xf32> to vector<16x32xf32>
    %142 = arith.addf %140, %141 : vector<16x32xf32>
    %143 = arith.addf %0, %142 : vector<16x32xf32>
    %cst_59 = arith.constant dense<0.000000e+00> : vector<16xf32>
    %144 = vector.multi_reduction <add>, %143, %cst_59 [1] : vector<16x32xf32> to vector<16xf32>
    %145 = vector.shape_cast %144 : vector<16xf32> to vector<16x1xf32>
    %cst_60 = arith.constant 3.200000e+01 : f32
    %146 = vector.broadcast %cst_60 : f32 to vector<16x1xf32>
    %147 = arith.divf %145, %146 : vector<16x1xf32>
    %148 = vector.broadcast %147 : vector<16x1xf32> to vector<16x32xf32>
    %149 = arith.subf %143, %148 : vector<16x32xf32>
    %150 = arith.mulf %149, %149 : vector<16x32xf32>
    %cst_61 = arith.constant dense<0.000000e+00> : vector<16xf32>
    %151 = vector.multi_reduction <add>, %150, %cst_61 [1] : vector<16x32xf32> to vector<16xf32>
    %152 = vector.shape_cast %151 : vector<16xf32> to vector<16x1xf32>
    %cst_62 = arith.constant 3.200000e+01 : f32
    %153 = vector.broadcast %cst_62 : f32 to vector<16x1xf32>
    %154 = arith.divf %152, %153 : vector<16x1xf32>
    %155 = vector.broadcast %147 : vector<16x1xf32> to vector<16x32xf32>
    %156 = arith.subf %143, %155 : vector<16x32xf32>
    %cst_63 = arith.constant 9.99999974E-6 : f32
    %157 = vector.broadcast %cst_63 : f32 to vector<16x1xf32>
    %158 = arith.addf %154, %157 : vector<16x1xf32>
    %159 = math.rsqrt %158 : vector<16x1xf32>
    %160 = vector.broadcast %159 : vector<16x1xf32> to vector<16x32xf32>
    %161 = arith.mulf %156, %160 : vector<16x32xf32>
    %162 = vector.broadcast %56 : vector<1x32xf32> to vector<16x32xf32>
    %163 = arith.mulf %161, %162 : vector<16x32xf32>
    %164 = vector.broadcast %57 : vector<1x32xf32> to vector<16x32xf32>
    %165 = arith.addf %163, %164 : vector<16x32xf32>
    %cst_64 = arith.constant dense<0.000000e+00> : vector<16x64xf32>
    %166 = tpu.matmul %165, %44, %cst_64 {dimension_numbers = #tpu.dot_dimension_numbers<[1], [0], [0], [1], [0, 0, 1, 1], [], []>} : vector<16x32xf32>, vector<32x64xf32>, vector<16x64xf32> -> vector<16x64xf32>
    %167 = vector.broadcast %50 : vector<1x64xf32> to vector<16x64xf32>
    %168 = arith.addf %166, %167 : vector<16x64xf32>
    %cst_65 = arith.constant 0.000000e+00 : f32
    %169 = vector.broadcast %cst_65 : f32 to vector<16x64xf32>
    %170 = arith.maximumf %168, %169 : vector<16x64xf32>
    %cst_66 = arith.constant dense<0.000000e+00> : vector<16x32xf32>
    %171 = tpu.matmul %170, %46, %cst_66 {dimension_numbers = #tpu.dot_dimension_numbers<[1], [0], [0], [1], [0, 0, 1, 1], [], []>} : vector<16x64xf32>, vector<64x32xf32>, vector<16x32xf32> -> vector<16x32xf32>
    %172 = vector.broadcast %55 : vector<1x32xf32> to vector<16x32xf32>
    %173 = arith.addf %171, %172 : vector<16x32xf32>
    %174 = arith.addf %165, %173 : vector<16x32xf32>
    %cst_67 = arith.constant dense<0.000000e+00> : vector<16xf32>
    %175 = vector.multi_reduction <add>, %174, %cst_67 [1] : vector<16x32xf32> to vector<16xf32>
    %176 = vector.shape_cast %175 : vector<16xf32> to vector<16x1xf32>
    %cst_68 = arith.constant 3.200000e+01 : f32
    %177 = vector.broadcast %cst_68 : f32 to vector<16x1xf32>
    %178 = arith.divf %176, %177 : vector<16x1xf32>
    %179 = vector.broadcast %178 : vector<16x1xf32> to vector<16x32xf32>
    %180 = arith.subf %174, %179 : vector<16x32xf32>
    %181 = arith.mulf %180, %180 : vector<16x32xf32>
    %cst_69 = arith.constant dense<0.000000e+00> : vector<16xf32>
    %182 = vector.multi_reduction <add>, %181, %cst_69 [1] : vector<16x32xf32> to vector<16xf32>
    %183 = vector.shape_cast %182 : vector<16xf32> to vector<16x1xf32>
    %cst_70 = arith.constant 3.200000e+01 : f32
    %184 = vector.broadcast %cst_70 : f32 to vector<16x1xf32>
    %185 = arith.divf %183, %184 : vector<16x1xf32>
    %186 = vector.broadcast %178 : vector<16x1xf32> to vector<16x32xf32>
    %187 = arith.subf %174, %186 : vector<16x32xf32>
    %cst_71 = arith.constant 9.99999974E-6 : f32
    %188 = vector.broadcast %cst_71 : f32 to vector<16x1xf32>
    %189 = arith.addf %185, %188 : vector<16x1xf32>
    %190 = math.rsqrt %189 : vector<16x1xf32>
    %191 = vector.broadcast %190 : vector<16x1xf32> to vector<16x32xf32>
    %192 = arith.mulf %187, %191 : vector<16x32xf32>
    %193 = vector.broadcast %58 : vector<1x32xf32> to vector<16x32xf32>
    %194 = arith.mulf %192, %193 : vector<16x32xf32>
    %195 = vector.broadcast %59 : vector<1x32xf32> to vector<16x32xf32>
    %196 = arith.addf %194, %195 : vector<16x32xf32>
    %c1 = arith.constant 1 : index
    %c0_72 = arith.constant 0 : index
    %c0_73 = arith.constant 0 : index
    %197 = vector.load %arg3[%c1, %c0_72, %c0_73] : memref<2x32x64xf32, #tpu.memory_space<vmem>>, vector<1x32x64xf32>
    %198 = vector.shape_cast %197 : vector<1x32x64xf32> to vector<32x64xf32>
    %c1_74 = arith.constant 1 : index
    %c0_75 = arith.constant 0 : index
    %c0_76 = arith.constant 0 : index
    %199 = vector.load %arg4[%c1_74, %c0_75, %c0_76] : memref<2x32x32xf32, #tpu.memory_space<vmem>>, vector<1x32x32xf32>
    %200 = vector.shape_cast %199 : vector<1x32x32xf32> to vector<32x32xf32>
    %c1_77 = arith.constant 1 : index
    %c0_78 = arith.constant 0 : index
    %c0_79 = arith.constant 0 : index
    %201 = vector.load %arg5[%c1_77, %c0_78, %c0_79] : memref<2x32x32xf32, #tpu.memory_space<vmem>>, vector<1x32x32xf32>
    %202 = vector.shape_cast %201 : vector<1x32x32xf32> to vector<32x32xf32>
    %c1_80 = arith.constant 1 : index
    %c0_81 = arith.constant 0 : index
    %c0_82 = arith.constant 0 : index
    %203 = vector.load %arg6[%c1_80, %c0_81, %c0_82] : memref<2x32x64xf32, #tpu.memory_space<vmem>>, vector<1x32x64xf32>
    %204 = vector.shape_cast %203 : vector<1x32x64xf32> to vector<32x64xf32>
    %c1_83 = arith.constant 1 : index
    %c0_84 = arith.constant 0 : index
    %c0_85 = arith.constant 0 : index
    %205 = vector.load %arg7[%c1_83, %c0_84, %c0_85] : memref<2x64x32xf32, #tpu.memory_space<vmem>>, vector<1x64x32xf32>
    %206 = vector.shape_cast %205 : vector<1x64x32xf32> to vector<64x32xf32>
    %c1_86 = arith.constant 1 : index
    %c0_87 = arith.constant 0 : index
    %c0_88 = arith.constant 0 : index
    %207 = vector.load %arg8[%c1_86, %c0_87, %c0_88] : memref<2x1x64xf32, #tpu.memory_space<vmem>>, vector<1x1x64xf32>
    %208 = vector.shape_cast %207 : vector<1x1x64xf32> to vector<1x64xf32>
    %c1_89 = arith.constant 1 : index
    %c0_90 = arith.constant 0 : index
    %c0_91 = arith.constant 0 : index
    %209 = vector.load %arg9[%c1_89, %c0_90, %c0_91] : memref<2x1x64xf32, #tpu.memory_space<vmem>>, vector<1x1x64xf32>
    %210 = vector.shape_cast %209 : vector<1x1x64xf32> to vector<1x64xf32>
    %c1_92 = arith.constant 1 : index
    %c0_93 = arith.constant 0 : index
    %c0_94 = arith.constant 0 : index
    %211 = vector.load %arg10[%c1_92, %c0_93, %c0_94] : memref<2x7x32xf32, #tpu.memory_space<vmem>>, vector<1x7x32xf32>
    %212 = vector.shape_cast %211 : vector<1x7x32xf32> to vector<7x32xf32>
    %213 = vector.extract_strided_slice %212 {offsets = [0, 0], sizes = [1, 32], strides = [1, 1]} : vector<7x32xf32> to vector<1x32xf32>
    %214 = vector.extract_strided_slice %212 {offsets = [1, 0], sizes = [1, 32], strides = [1, 1]} : vector<7x32xf32> to vector<1x32xf32>
    %215 = vector.extract_strided_slice %212 {offsets = [2, 0], sizes = [1, 32], strides = [1, 1]} : vector<7x32xf32> to vector<1x32xf32>
    %216 = vector.extract_strided_slice %212 {offsets = [3, 0], sizes = [1, 32], strides = [1, 1]} : vector<7x32xf32> to vector<1x32xf32>
    %217 = vector.extract_strided_slice %212 {offsets = [4, 0], sizes = [1, 32], strides = [1, 1]} : vector<7x32xf32> to vector<1x32xf32>
    %218 = vector.extract_strided_slice %212 {offsets = [5, 0], sizes = [1, 32], strides = [1, 1]} : vector<7x32xf32> to vector<1x32xf32>
    %219 = vector.extract_strided_slice %212 {offsets = [6, 0], sizes = [1, 32], strides = [1, 1]} : vector<7x32xf32> to vector<1x32xf32>
    %220 = arith.addf %196, %1 : vector<16x32xf32>
    %cst_95 = arith.constant dense<0.000000e+00> : vector<16x64xf32>
    %221 = tpu.matmul %220, %198, %cst_95 {dimension_numbers = #tpu.dot_dimension_numbers<[1], [0], [0], [1], [0, 0, 1, 1], [], []>} : vector<16x32xf32>, vector<32x64xf32>, vector<16x64xf32> -> vector<16x64xf32>
    %222 = vector.broadcast %208 : vector<1x64xf32> to vector<16x64xf32>
    %223 = arith.addf %221, %222 : vector<16x64xf32>
    %cst_96 = arith.constant dense<0.000000e+00> : vector<16x32xf32>
    %224 = tpu.matmul %196, %200, %cst_96 {dimension_numbers = #tpu.dot_dimension_numbers<[1], [0], [0], [1], [0, 0, 1, 1], [], []>} : vector<16x32xf32>, vector<32x32xf32>, vector<16x32xf32> -> vector<16x32xf32>
    %225 = vector.broadcast %213 : vector<1x32xf32> to vector<16x32xf32>
    %226 = arith.addf %224, %225 : vector<16x32xf32>
    %227 = vector.extract_strided_slice %223 {offsets = [0, 0], sizes = [16, 32], strides = [1, 1]} : vector<16x64xf32> to vector<16x32xf32>
    %cst_97 = arith.constant 0.353553385 : f32
    %228 = vector.broadcast %cst_97 : f32 to vector<16x32xf32>
    %229 = arith.mulf %227, %228 : vector<16x32xf32>
    %230 = vector.extract_strided_slice %223 {offsets = [0, 32], sizes = [16, 32], strides = [1, 1]} : vector<16x64xf32> to vector<16x32xf32>
    %231 = vector.extract_strided_slice %229 {offsets = [0, 0], sizes = [16, 8], strides = [1, 1]} : vector<16x32xf32> to vector<16x8xf32>
    %232 = vector.extract_strided_slice %230 {offsets = [0, 0], sizes = [16, 8], strides = [1, 1]} : vector<16x32xf32> to vector<16x8xf32>
    %233 = vector.extract_strided_slice %226 {offsets = [0, 0], sizes = [16, 8], strides = [1, 1]} : vector<16x32xf32> to vector<16x8xf32>
    %cst_98 = arith.constant dense<0.000000e+00> : vector<16x16xf32>
    %234 = tpu.matmul %231, %232, %cst_98 {dimension_numbers = #tpu.dot_dimension_numbers<[1], [1], [0], [0], [0, 0, 1, 0], [], []>} : vector<16x8xf32>, vector<16x8xf32>, vector<16x16xf32> -> vector<16x16xf32>
    %cst_99 = arith.constant -1.000000e+30 : f32
    %235 = vector.broadcast %cst_99 : f32 to vector<16x16xf32>
    %236 = arith.select %36, %234, %235 : vector<16x16xi1>, vector<16x16xf32>
    %cst_100 = arith.constant dense<0xFF800000> : vector<16xf32>
    %237 = vector.multi_reduction <maximumf>, %236, %cst_100 [1] : vector<16x16xf32> to vector<16xf32>
    %238 = vector.shape_cast %237 : vector<16xf32> to vector<16x1xf32>
    %239 = vector.broadcast %238 : vector<16x1xf32> to vector<16x16xf32>
    %240 = arith.subf %236, %239 : vector<16x16xf32>
    %241 = math.exp %240 : vector<16x16xf32>
    %cst_101 = arith.constant dense<0.000000e+00> : vector<16xf32>
    %242 = vector.multi_reduction <add>, %241, %cst_101 [1] : vector<16x16xf32> to vector<16xf32>
    %243 = vector.shape_cast %242 : vector<16xf32> to vector<16x1xf32>
    %244 = tpu.reciprocal %243 {approx = true} : vector<16x1xf32> -> vector<16x1xf32>
    %245 = vector.broadcast %244 : vector<16x1xf32> to vector<16x16xf32>
    %246 = arith.mulf %241, %245 : vector<16x16xf32>
    %cst_102 = arith.constant dense<0.000000e+00> : vector<16x8xf32>
    %247 = tpu.matmul %246, %233, %cst_102 {dimension_numbers = #tpu.dot_dimension_numbers<[1], [0], [0], [1], [0, 0, 1, 1], [], []>} : vector<16x16xf32>, vector<16x8xf32>, vector<16x8xf32> -> vector<16x8xf32>
    %248 = vector.extract_strided_slice %229 {offsets = [0, 8], sizes = [16, 8], strides = [1, 1]} : vector<16x32xf32> to vector<16x8xf32>
    %249 = vector.extract_strided_slice %230 {offsets = [0, 8], sizes = [16, 8], strides = [1, 1]} : vector<16x32xf32> to vector<16x8xf32>
    %250 = vector.extract_strided_slice %226 {offsets = [0, 8], sizes = [16, 8], strides = [1, 1]} : vector<16x32xf32> to vector<16x8xf32>
    %cst_103 = arith.constant dense<0.000000e+00> : vector<16x16xf32>
    %251 = tpu.matmul %248, %249, %cst_103 {dimension_numbers = #tpu.dot_dimension_numbers<[1], [1], [0], [0], [0, 0, 1, 0], [], []>} : vector<16x8xf32>, vector<16x8xf32>, vector<16x16xf32> -> vector<16x16xf32>
    %cst_104 = arith.constant -1.000000e+30 : f32
    %252 = vector.broadcast %cst_104 : f32 to vector<16x16xf32>
    %253 = arith.select %36, %251, %252 : vector<16x16xi1>, vector<16x16xf32>
    %cst_105 = arith.constant dense<0xFF800000> : vector<16xf32>
    %254 = vector.multi_reduction <maximumf>, %253, %cst_105 [1] : vector<16x16xf32> to vector<16xf32>
    %255 = vector.shape_cast %254 : vector<16xf32> to vector<16x1xf32>
    %256 = vector.broadcast %255 : vector<16x1xf32> to vector<16x16xf32>
    %257 = arith.subf %253, %256 : vector<16x16xf32>
    %258 = math.exp %257 : vector<16x16xf32>
    %cst_106 = arith.constant dense<0.000000e+00> : vector<16xf32>
    %259 = vector.multi_reduction <add>, %258, %cst_106 [1] : vector<16x16xf32> to vector<16xf32>
    %260 = vector.shape_cast %259 : vector<16xf32> to vector<16x1xf32>
    %261 = tpu.reciprocal %260 {approx = true} : vector<16x1xf32> -> vector<16x1xf32>
    %262 = vector.broadcast %261 : vector<16x1xf32> to vector<16x16xf32>
    %263 = arith.mulf %258, %262 : vector<16x16xf32>
    %cst_107 = arith.constant dense<0.000000e+00> : vector<16x8xf32>
    %264 = tpu.matmul %263, %250, %cst_107 {dimension_numbers = #tpu.dot_dimension_numbers<[1], [0], [0], [1], [0, 0, 1, 1], [], []>} : vector<16x16xf32>, vector<16x8xf32>, vector<16x8xf32> -> vector<16x8xf32>
    %265 = vector.extract_strided_slice %229 {offsets = [0, 16], sizes = [16, 8], strides = [1, 1]} : vector<16x32xf32> to vector<16x8xf32>
    %266 = vector.extract_strided_slice %230 {offsets = [0, 16], sizes = [16, 8], strides = [1, 1]} : vector<16x32xf32> to vector<16x8xf32>
    %267 = vector.extract_strided_slice %226 {offsets = [0, 16], sizes = [16, 8], strides = [1, 1]} : vector<16x32xf32> to vector<16x8xf32>
    %cst_108 = arith.constant dense<0.000000e+00> : vector<16x16xf32>
    %268 = tpu.matmul %265, %266, %cst_108 {dimension_numbers = #tpu.dot_dimension_numbers<[1], [1], [0], [0], [0, 0, 1, 0], [], []>} : vector<16x8xf32>, vector<16x8xf32>, vector<16x16xf32> -> vector<16x16xf32>
    %cst_109 = arith.constant -1.000000e+30 : f32
    %269 = vector.broadcast %cst_109 : f32 to vector<16x16xf32>
    %270 = arith.select %36, %268, %269 : vector<16x16xi1>, vector<16x16xf32>
    %cst_110 = arith.constant dense<0xFF800000> : vector<16xf32>
    %271 = vector.multi_reduction <maximumf>, %270, %cst_110 [1] : vector<16x16xf32> to vector<16xf32>
    %272 = vector.shape_cast %271 : vector<16xf32> to vector<16x1xf32>
    %273 = vector.broadcast %272 : vector<16x1xf32> to vector<16x16xf32>
    %274 = arith.subf %270, %273 : vector<16x16xf32>
    %275 = math.exp %274 : vector<16x16xf32>
    %cst_111 = arith.constant dense<0.000000e+00> : vector<16xf32>
    %276 = vector.multi_reduction <add>, %275, %cst_111 [1] : vector<16x16xf32> to vector<16xf32>
    %277 = vector.shape_cast %276 : vector<16xf32> to vector<16x1xf32>
    %278 = tpu.reciprocal %277 {approx = true} : vector<16x1xf32> -> vector<16x1xf32>
    %279 = vector.broadcast %278 : vector<16x1xf32> to vector<16x16xf32>
    %280 = arith.mulf %275, %279 : vector<16x16xf32>
    %cst_112 = arith.constant dense<0.000000e+00> : vector<16x8xf32>
    %281 = tpu.matmul %280, %267, %cst_112 {dimension_numbers = #tpu.dot_dimension_numbers<[1], [0], [0], [1], [0, 0, 1, 1], [], []>} : vector<16x16xf32>, vector<16x8xf32>, vector<16x8xf32> -> vector<16x8xf32>
    %282 = vector.extract_strided_slice %229 {offsets = [0, 24], sizes = [16, 8], strides = [1, 1]} : vector<16x32xf32> to vector<16x8xf32>
    %283 = vector.extract_strided_slice %230 {offsets = [0, 24], sizes = [16, 8], strides = [1, 1]} : vector<16x32xf32> to vector<16x8xf32>
    %284 = vector.extract_strided_slice %226 {offsets = [0, 24], sizes = [16, 8], strides = [1, 1]} : vector<16x32xf32> to vector<16x8xf32>
    %cst_113 = arith.constant dense<0.000000e+00> : vector<16x16xf32>
    %285 = tpu.matmul %282, %283, %cst_113 {dimension_numbers = #tpu.dot_dimension_numbers<[1], [1], [0], [0], [0, 0, 1, 0], [], []>} : vector<16x8xf32>, vector<16x8xf32>, vector<16x16xf32> -> vector<16x16xf32>
    %cst_114 = arith.constant -1.000000e+30 : f32
    %286 = vector.broadcast %cst_114 : f32 to vector<16x16xf32>
    %287 = arith.select %36, %285, %286 : vector<16x16xi1>, vector<16x16xf32>
    %cst_115 = arith.constant dense<0xFF800000> : vector<16xf32>
    %288 = vector.multi_reduction <maximumf>, %287, %cst_115 [1] : vector<16x16xf32> to vector<16xf32>
    %289 = vector.shape_cast %288 : vector<16xf32> to vector<16x1xf32>
    %290 = vector.broadcast %289 : vector<16x1xf32> to vector<16x16xf32>
    %291 = arith.subf %287, %290 : vector<16x16xf32>
    %292 = math.exp %291 : vector<16x16xf32>
    %cst_116 = arith.constant dense<0.000000e+00> : vector<16xf32>
    %293 = vector.multi_reduction <add>, %292, %cst_116 [1] : vector<16x16xf32> to vector<16xf32>
    %294 = vector.shape_cast %293 : vector<16xf32> to vector<16x1xf32>
    %295 = tpu.reciprocal %294 {approx = true} : vector<16x1xf32> -> vector<16x1xf32>
    %296 = vector.broadcast %295 : vector<16x1xf32> to vector<16x16xf32>
    %297 = arith.mulf %292, %296 : vector<16x16xf32>
    %cst_117 = arith.constant dense<0.000000e+00> : vector<16x8xf32>
    %298 = tpu.matmul %297, %284, %cst_117 {dimension_numbers = #tpu.dot_dimension_numbers<[1], [0], [0], [1], [0, 0, 1, 1], [], []>} : vector<16x16xf32>, vector<16x8xf32>, vector<16x8xf32> -> vector<16x8xf32>
    %299 = tpu.concatenate %247, %264, %281, %298 in 1 : vector<16x8xf32>, vector<16x8xf32>, vector<16x8xf32>, vector<16x8xf32> -> vector<16x32xf32>
    %cst_118 = arith.constant dense<0.000000e+00> : vector<16x32xf32>
    %300 = tpu.matmul %299, %202, %cst_118 {dimension_numbers = #tpu.dot_dimension_numbers<[1], [0], [0], [1], [0, 0, 1, 1], [], []>} : vector<16x32xf32>, vector<32x32xf32>, vector<16x32xf32> -> vector<16x32xf32>
    %301 = vector.broadcast %214 : vector<1x32xf32> to vector<16x32xf32>
    %302 = arith.addf %300, %301 : vector<16x32xf32>
    %303 = arith.addf %196, %302 : vector<16x32xf32>
    %cst_119 = arith.constant dense<0.000000e+00> : vector<16xf32>
    %304 = vector.multi_reduction <add>, %303, %cst_119 [1] : vector<16x32xf32> to vector<16xf32>
    %305 = vector.shape_cast %304 : vector<16xf32> to vector<16x1xf32>
    %cst_120 = arith.constant 3.200000e+01 : f32
    %306 = vector.broadcast %cst_120 : f32 to vector<16x1xf32>
    %307 = arith.divf %305, %306 : vector<16x1xf32>
    %308 = vector.broadcast %307 : vector<16x1xf32> to vector<16x32xf32>
    %309 = arith.subf %303, %308 : vector<16x32xf32>
    %310 = arith.mulf %309, %309 : vector<16x32xf32>
    %cst_121 = arith.constant dense<0.000000e+00> : vector<16xf32>
    %311 = vector.multi_reduction <add>, %310, %cst_121 [1] : vector<16x32xf32> to vector<16xf32>
    %312 = vector.shape_cast %311 : vector<16xf32> to vector<16x1xf32>
    %cst_122 = arith.constant 3.200000e+01 : f32
    %313 = vector.broadcast %cst_122 : f32 to vector<16x1xf32>
    %314 = arith.divf %312, %313 : vector<16x1xf32>
    %315 = vector.broadcast %307 : vector<16x1xf32> to vector<16x32xf32>
    %316 = arith.subf %303, %315 : vector<16x32xf32>
    %cst_123 = arith.constant 9.99999974E-6 : f32
    %317 = vector.broadcast %cst_123 : f32 to vector<16x1xf32>
    %318 = arith.addf %314, %317 : vector<16x1xf32>
    %319 = math.rsqrt %318 : vector<16x1xf32>
    %320 = vector.broadcast %319 : vector<16x1xf32> to vector<16x32xf32>
    %321 = arith.mulf %316, %320 : vector<16x32xf32>
    %322 = vector.broadcast %216 : vector<1x32xf32> to vector<16x32xf32>
    %323 = arith.mulf %321, %322 : vector<16x32xf32>
    %324 = vector.broadcast %217 : vector<1x32xf32> to vector<16x32xf32>
    %325 = arith.addf %323, %324 : vector<16x32xf32>
    %cst_124 = arith.constant dense<0.000000e+00> : vector<16x64xf32>
    %326 = tpu.matmul %325, %204, %cst_124 {dimension_numbers = #tpu.dot_dimension_numbers<[1], [0], [0], [1], [0, 0, 1, 1], [], []>} : vector<16x32xf32>, vector<32x64xf32>, vector<16x64xf32> -> vector<16x64xf32>
    %327 = vector.broadcast %210 : vector<1x64xf32> to vector<16x64xf32>
    %328 = arith.addf %326, %327 : vector<16x64xf32>
    %cst_125 = arith.constant 0.000000e+00 : f32
    %329 = vector.broadcast %cst_125 : f32 to vector<16x64xf32>
    %330 = arith.maximumf %328, %329 : vector<16x64xf32>
    %cst_126 = arith.constant dense<0.000000e+00> : vector<16x32xf32>
    %331 = tpu.matmul %330, %206, %cst_126 {dimension_numbers = #tpu.dot_dimension_numbers<[1], [0], [0], [1], [0, 0, 1, 1], [], []>} : vector<16x64xf32>, vector<64x32xf32>, vector<16x32xf32> -> vector<16x32xf32>
    %332 = vector.broadcast %215 : vector<1x32xf32> to vector<16x32xf32>
    %333 = arith.addf %331, %332 : vector<16x32xf32>
    %334 = arith.addf %325, %333 : vector<16x32xf32>
    %cst_127 = arith.constant dense<0.000000e+00> : vector<16xf32>
    %335 = vector.multi_reduction <add>, %334, %cst_127 [1] : vector<16x32xf32> to vector<16xf32>
    %336 = vector.shape_cast %335 : vector<16xf32> to vector<16x1xf32>
    %cst_128 = arith.constant 3.200000e+01 : f32
    %337 = vector.broadcast %cst_128 : f32 to vector<16x1xf32>
    %338 = arith.divf %336, %337 : vector<16x1xf32>
    %339 = vector.broadcast %338 : vector<16x1xf32> to vector<16x32xf32>
    %340 = arith.subf %334, %339 : vector<16x32xf32>
    %341 = arith.mulf %340, %340 : vector<16x32xf32>
    %cst_129 = arith.constant dense<0.000000e+00> : vector<16xf32>
    %342 = vector.multi_reduction <add>, %341, %cst_129 [1] : vector<16x32xf32> to vector<16xf32>
    %343 = vector.shape_cast %342 : vector<16xf32> to vector<16x1xf32>
    %cst_130 = arith.constant 3.200000e+01 : f32
    %344 = vector.broadcast %cst_130 : f32 to vector<16x1xf32>
    %345 = arith.divf %343, %344 : vector<16x1xf32>
    %346 = vector.broadcast %338 : vector<16x1xf32> to vector<16x32xf32>
    %347 = arith.subf %334, %346 : vector<16x32xf32>
    %cst_131 = arith.constant 9.99999974E-6 : f32
    %348 = vector.broadcast %cst_131 : f32 to vector<16x1xf32>
    %349 = arith.addf %345, %348 : vector<16x1xf32>
    %350 = math.rsqrt %349 : vector<16x1xf32>
    %351 = vector.broadcast %350 : vector<16x1xf32> to vector<16x32xf32>
    %352 = arith.mulf %347, %351 : vector<16x32xf32>
    %353 = vector.broadcast %218 : vector<1x32xf32> to vector<16x32xf32>
    %354 = arith.mulf %352, %353 : vector<16x32xf32>
    %355 = vector.broadcast %219 : vector<1x32xf32> to vector<16x32xf32>
    %356 = arith.addf %354, %355 : vector<16x32xf32>
    %c0_132 = arith.constant 0 : index
    %c0_133 = arith.constant 0 : index
    %357 = vector.load %arg11[%c0_132, %c0_133] : memref<2x32xf32, #tpu.memory_space<vmem>>, vector<2x32xf32>
    %358 = vector.extract_strided_slice %357 {offsets = [0, 0], sizes = [1, 32], strides = [1, 1]} : vector<2x32xf32> to vector<1x32xf32>
    %359 = vector.extract_strided_slice %357 {offsets = [1, 0], sizes = [1, 32], strides = [1, 1]} : vector<2x32xf32> to vector<1x32xf32>
    %cst_134 = arith.constant dense<0.000000e+00> : vector<16xf32>
    %360 = vector.multi_reduction <add>, %356, %cst_134 [1] : vector<16x32xf32> to vector<16xf32>
    %361 = vector.shape_cast %360 : vector<16xf32> to vector<16x1xf32>
    %cst_135 = arith.constant 3.200000e+01 : f32
    %362 = vector.broadcast %cst_135 : f32 to vector<16x1xf32>
    %363 = arith.divf %361, %362 : vector<16x1xf32>
    %364 = vector.broadcast %363 : vector<16x1xf32> to vector<16x32xf32>
    %365 = arith.subf %356, %364 : vector<16x32xf32>
    %366 = arith.mulf %365, %365 : vector<16x32xf32>
    %cst_136 = arith.constant dense<0.000000e+00> : vector<16xf32>
    %367 = vector.multi_reduction <add>, %366, %cst_136 [1] : vector<16x32xf32> to vector<16xf32>
    %368 = vector.shape_cast %367 : vector<16xf32> to vector<16x1xf32>
    %cst_137 = arith.constant 3.200000e+01 : f32
    %369 = vector.broadcast %cst_137 : f32 to vector<16x1xf32>
    %370 = arith.divf %368, %369 : vector<16x1xf32>
    %371 = vector.broadcast %363 : vector<16x1xf32> to vector<16x32xf32>
    %372 = arith.subf %356, %371 : vector<16x32xf32>
    %cst_138 = arith.constant 9.99999974E-6 : f32
    %373 = vector.broadcast %cst_138 : f32 to vector<16x1xf32>
    %374 = arith.addf %370, %373 : vector<16x1xf32>
    %375 = math.rsqrt %374 : vector<16x1xf32>
    %376 = vector.broadcast %375 : vector<16x1xf32> to vector<16x32xf32>
    %377 = arith.mulf %372, %376 : vector<16x32xf32>
    %378 = vector.broadcast %358 : vector<1x32xf32> to vector<16x32xf32>
    %379 = arith.mulf %377, %378 : vector<16x32xf32>
    %380 = vector.broadcast %359 : vector<1x32xf32> to vector<16x32xf32>
    %381 = arith.addf %379, %380 : vector<16x32xf32>
    %c0_139 = arith.constant 0 : index
    %c0_140 = arith.constant 0 : index
    %382 = vector.load %arg12[%c0_139, %c0_140] : memref<16x32xf32, #tpu.memory_space<vmem>>, vector<16x32xf32>
    tpu.vector_store %arg12[%c0_139, %c0_140], %381 {strides = array<i32>} : memref<16x32xf32, #tpu.memory_space<vmem>>, vector<16x32xf32>,
    return
  }
  func.func @transform_0(%arg0: i32) -> (i32, i32) {
    %c0_i32 = arith.constant 0 : i32
    %c0_i32_0 = arith.constant 0 : i32
    %c0_i32_1 = arith.constant 0 : i32
    return %c0_i32, %c0_i32_0 : i32, i32
  }
  func.func @transform_1(%arg0: i32) -> (i32, i32) {
    %c0_i32 = arith.constant 0 : i32
    %c0_i32_0 = arith.constant 0 : i32
    %c0_i32_1 = arith.constant 0 : i32
    return %c0_i32, %c0_i32_0 : i32, i32
  }
  func.func @transform_2(%arg0: i32) -> (i32, i32, i32) {
    %c0_i32 = arith.constant 0 : i32
    %c0_i32_0 = arith.constant 0 : i32
    %c0_i32_1 = arith.constant 0 : i32
    %c0_i32_2 = arith.constant 0 : i32
    return %c0_i32, %c0_i32_0, %c0_i32_1 : i32, i32, i32
  }
  func.func @transform_3(%arg0: i32) -> (i32, i32, i32) {
    %c0_i32 = arith.constant 0 : i32
    %c0_i32_0 = arith.constant 0 : i32
    %c0_i32_1 = arith.constant 0 : i32
    %c0_i32_2 = arith.constant 0 : i32
    return %c0_i32, %c0_i32_0, %c0_i32_1 : i32, i32, i32
  }
  func.func @transform_4(%arg0: i32) -> (i32, i32, i32) {
    %c0_i32 = arith.constant 0 : i32
    %c0_i32_0 = arith.constant 0 : i32
    %c0_i32_1 = arith.constant 0 : i32
    %c0_i32_2 = arith.constant 0 : i32
    return %c0_i32, %c0_i32_0, %c0_i32_1 : i32, i32, i32
  }
  func.func @transform_5(%arg0: i32) -> (i32, i32, i32) {
    %c0_i32 = arith.constant 0 : i32
    %c0_i32_0 = arith.constant 0 : i32
    %c0_i32_1 = arith.constant 0 : i32
    %c0_i32_2 = arith.constant 0 : i32
    return %c0_i32, %c0_i32_0, %c0_i32_1 : i32, i32, i32
  }
  func.func @transform_6(%arg0: i32) -> (i32, i32, i32) {
    %c0_i32 = arith.constant 0 : i32
    %c0_i32_0 = arith.constant 0 : i32
    %c0_i32_1 = arith.constant 0 : i32
    %c0_i32_2 = arith.constant 0 : i32
    return %c0_i32, %c0_i32_0, %c0_i32_1 : i32, i32, i32
  }
  func.func @transform_7(%arg0: i32) -> (i32, i32, i32) {
    %c0_i32 = arith.constant 0 : i32
    %c0_i32_0 = arith.constant 0 : i32
    %c0_i32_1 = arith.constant 0 : i32
    %c0_i32_2 = arith.constant 0 : i32
    return %c0_i32, %c0_i32_0, %c0_i32_1 : i32, i32, i32
  }
  func.func @transform_8(%arg0: i32) -> (i32, i32, i32) {
    %c0_i32 = arith.constant 0 : i32
    %c0_i32_0 = arith.constant 0 : i32
    %c0_i32_1 = arith.constant 0 : i32
    %c0_i32_2 = arith.constant 0 : i32
    return %c0_i32, %c0_i32_0, %c0_i32_1 : i32, i32, i32
  }
  func.func @transform_9(%arg0: i32) -> (i32, i32, i32) {
    %c0_i32 = arith.constant 0 : i32
    %c0_i32_0 = arith.constant 0 : i32
    %c0_i32_1 = arith.constant 0 : i32
    %c0_i32_2 = arith.constant 0 : i32
    return %c0_i32, %c0_i32_0, %c0_i32_1 : i32, i32, i32
  }
  func.func @transform_10(%arg0: i32) -> (i32, i32) {
    %c0_i32 = arith.constant 0 : i32
    %c0_i32_0 = arith.constant 0 : i32
    %c0_i32_1 = arith.constant 0 : i32
    return %c0_i32, %c0_i32_0 : i32, i32
  }
  func.func @transform_11(%arg0: i32) -> (i32, i32) {
    %c0_i32 = arith.constant 0 : i32
    %c0_i32_0 = arith.constant 0 : i32
    %c0_i32_1 = arith.constant 0 : i32
    return %c0_i32, %c0_i32_0 : i32, i32
  }
}

</mosaic_0001>

<llo_original>
// kernel: tpu_custom_call.1
$region0: #{tpu_custom_call.1}
  #allocation0 [shape = 'u32[]', space=smem, size = 0x4, offset = 0x4, fixed_abs, tag = 'smem constant byte address 0x4 - core index']
  #allocation1 [shape = 'u32[72,128]{1,0:T(1,128)}', space=vmem, size = 0x9000, scoped, tag = 'internal scratch']
  %s0 = inlined_call_operand.vmem [shape: f32[16,32], index: 0, kind: input, shape index: {}]
  %s1 = inlined_call_operand.hbm [shape: f32[16,32], index: 1, kind: input, shape index: {}]
  %s2 = inlined_call_operand.vmem [shape: f32[2,32,64], index: 2, kind: input, shape index: {}]
  %s3 = inlined_call_operand.vmem [shape: f32[2,32,32], index: 3, kind: input, shape index: {}]
  %s4 = inlined_call_operand.vmem [shape: f32[2,32,32], index: 4, kind: input, shape index: {}]
  %s5 = inlined_call_operand.hbm [shape: f32[2,32,64], index: 5, kind: input, shape index: {}]
  %s6 = inlined_call_operand.vmem [shape: f32[2,64,32], index: 6, kind: input, shape index: {}]
  %s7 = inlined_call_operand.vmem [shape: f32[2,1,64], index: 7, kind: input, shape index: {}]
  %s8 = inlined_call_operand.vmem [shape: f32[2,1,64], index: 8, kind: input, shape index: {}]
  %s9 = inlined_call_operand.vmem [shape: f32[2,7,32], index: 9, kind: input, shape index: {}]
  %s10 = inlined_call_operand.vmem [shape: f32[2,32], index: 10, kind: input, shape index: {}]
  %s11 = inlined_call_operand.hbm [shape: f32[16,32], index: 11, kind: output, shape index: {}]
  %s12 = sld [smem:[#allocation0]]
  $region62: #{tpu_custom_call.1} parent=0
    _
  %s14 = ssub.s32 1, %s12
  %s15 = scalar_select 0, %s14, %s12
  $region1: #{tpu_custom_call.1} parent=0
    #allocation2 [shape = 'u8[8192]{0}', space=vmem, size = 0x2000, scoped, tag = 'input window, operand 1, single buffered']
    #allocation3 [shape = 's32[1]{0}', space=sflag, size = 0x4, scoped, tag = 'scoped memory for tpu_custom_call.1']
    #allocation4 [shape = 's32[1]{0}', space=sflag, size = 0x4, scoped, tag = 'scoped memory for tpu_custom_call.1']
    #allocation5 [shape = 'u8[32768]{0}', space=vmem, size = 0x8000, scoped, tag = 'input window, operand 5, single buffered']
    #allocation6 [shape = 's32[1]{0}', space=sflag, size = 0x4, scoped, tag = 'scoped memory for tpu_custom_call.1']
    #allocation7 [shape = 'u8[8192]{0}', space=vmem, size = 0x2000, scoped, tag = 'output window, operand 0, single buffered']
    %16 = vsyncpa [#allocation3], 0
    %17 = vsyncpa [#allocation6], 0
    %18 = vsyncpa [#allocation4], 0
    // Predicated region
    $region2: #{tpu_custom_call.1} parent=1 // pred_check
      _
    $region3: #{tpu_custom_call.1} parent=1 // pred_check_branch
      %20 = sbr.rel (0) target = $region5
    $region4: #{tpu_custom_call.1} parent=1 // pred_region
      _
    $region5: #{tpu_custom_call.1} parent=1 // pred_fallthru
      _
    // Predicated region
    $region6: #{tpu_custom_call.1} parent=1 // pred_check
      _
    $region7: #{tpu_custom_call.1} parent=1 // pred_check_branch
      %22 = sbr.rel (0) target = $region9
    $region8: #{tpu_custom_call.1} parent=1 // pred_region
      %24 = vsyncadd [#allocation3], 0
      %s25 = sshll.u32 %s1, 4
      %s26 = int_to_ptr.hbm [resolvable:$true] %s25
      %s27 = sshll.u32 [#allocation2], 4
      %s28 = int_to_ptr.vmem [resolvable:$true] %s27
      %33 = dma.hbm_to_vmem [thread:$0]  %s26, 256, %s28, [#allocation3], 128, 128, 8
    $region9: #{tpu_custom_call.1} parent=1 // pred_fallthru
      _
    // Predicated region
    $region10: #{tpu_custom_call.1} parent=1 // pred_check
      _
    $region11: #{tpu_custom_call.1} parent=1 // pred_check_branch
      %35 = sbr.rel (0) target = $region13
    $region12: #{tpu_custom_call.1} parent=1 // pred_region
      _
    $region13: #{tpu_custom_call.1} parent=1 // pred_fallthru
      _
    // Predicated region
    $region14: #{tpu_custom_call.1} parent=1 // pred_check
      _
    $region15: #{tpu_custom_call.1} parent=1 // pred_check_branch
      %37 = sbr.rel (0) target = $region17
    $region16: #{tpu_custom_call.1} parent=1 // pred_region
      _
    $region17: #{tpu_custom_call.1} parent=1 // pred_fallthru
      _
    // Predicated region
    $region18: #{tpu_custom_call.1} parent=1 // pred_check
      _
    $region19: #{tpu_custom_call.1} parent=1 // pred_check_branch
      %39 = sbr.rel (0) target = $region21
    $region20: #{tpu_custom_call.1} parent=1 // pred_region
      _
    $region21: #{tpu_custom_call.1} parent=1 // pred_fallthru
      _
    // Predicated region
    $region22: #{tpu_custom_call.1} parent=1 // pred_check
      _
    $region23: #{tpu_custom_call.1} parent=1 // pred_check_branch
      %41 = sbr.rel (0) target = $region25
    $region24: #{tpu_custom_call.1} parent=1 // pred_region
      %43 = vsyncadd [#allocation6], 0
      %s44 = sshll.u32 %s5, 4
      %s45 = int_to_ptr.hbm [resolvable:$true] %s44
      %s46 = sshll.u32 [#allocation5], 4
      %s47 = int_to_ptr.vmem [resolvable:$true] %s46
      %52 = dma.hbm_to_vmem [thread:$0]  %s45, 1024, %s47, [#allocation6], 128, 128, 8
    $region25: #{tpu_custom_call.1} parent=1 // pred_fallthru
      _
    // Predicated region
    $region26: #{tpu_custom_call.1} parent=1 // pred_check
      _
    $region27: #{tpu_custom_call.1} parent=1 // pred_check_branch
      %54 = sbr.rel (0) target = $region29
    $region28: #{tpu_custom_call.1} parent=1 // pred_region
      _
    $region29: #{tpu_custom_call.1} parent=1 // pred_fallthru
      _
    // Predicated region
    $region30: #{tpu_custom_call.1} parent=1 // pred_check
      _
    $region31: #{tpu_custom_call.1} parent=1 // pred_check_branch
      %56 = sbr.rel (0) target = $region33
    $region32: #{tpu_custom_call.1} parent=1 // pred_region
      _
    $region33: #{tpu_custom_call.1} parent=1 // pred_fallthru
      _
    // Predicated region
    $region34: #{tpu_custom_call.1} parent=1 // pred_check
      _
    $region35: #{tpu_custom_call.1} parent=1 // pred_check_branch
      %58 = sbr.rel (0) target = $region37
    $region36: #{tpu_custom_call.1} parent=1 // pred_region
      _
    $region37: #{tpu_custom_call.1} parent=1 // pred_fallthru
      _
    // Predicated region
    $region38: #{tpu_custom_call.1} parent=1 // pred_check
      _
    $region39: #{tpu_custom_call.1} parent=1 // pred_check_branch
      %60 = sbr.rel (0) target = $region41
    $region40: #{tpu_custom_call.1} parent=1 // pred_region
      _
    $region41: #{tpu_custom_call.1} parent=1 // pred_fallthru
      _
    // Predicated region
    $region42: #{tpu_custom_call.1} parent=1 // pred_check
      _
    $region43: #{tpu_custom_call.1} parent=1 // pred_check_branch
      %62 = sbr.rel (0) target = $region45
    $region44: #{tpu_custom_call.1} parent=1 // pred_region
      _
    $region45: #{tpu_custom_call.1} parent=1 // pred_fallthru
      _
    // Predicated region
    $region46: #{tpu_custom_call.1} parent=1 // pred_check
      _
    $region47: #{tpu_custom_call.1} parent=1 // pred_check_branch
      %64 = sbr.rel (0) target = $region49
    $region48: #{tpu_custom_call.1} parent=1 // pred_region
      %66 = dma.done [#allocation3], 256
    $region49: #{tpu_custom_call.1} parent=1 // pred_fallthru
      _
    // Predicated region
    $region50: #{tpu_custom_call.1} parent=1 // pred_check
      _
    $region51: #{tpu_custom_call.1} parent=1 // pred_check_branch
      %68 = sbr.rel (0) target = $region53
    $region52: #{tpu_custom_call.1} parent=1 // pred_region
      %70 = dma.done [#allocation6], 1024
    $region53: #{tpu_custom_call.1} parent=1 // pred_fallthru
      _
    %v71 = vld [vmem:[%s0] sm:$0xff]
    %v72 = vld [vmem:[%s0 + $0x8] sm:$0xff]
    %v73 = vld [vmem:[#allocation2] sm:$0xff]
    %v74 = vld [vmem:[#allocation2 + $0x8] sm:$0xff]
    %v75 = vlaneseq
    %v76 = vshrl.u32 %v75, 7
    %v77 = vadd.s32 %v76, 8
    %vm78 = vcmp.lt.s32.totalorder %v76, 0
    %v79 = vsub.s32 0, %v76
    %v80 = vsel %vm78, %v79, %v76
    %v81 = vshrl.u32 %v80, 1
    %v82 = vand.u32 %v80, 1
    %v83 = vsub.s32 0, %v82
    %v84 = vsel %vm78, %v83, %v82
    %vm85 = vcmp.lt.s32.totalorder %v77, 0
    %v86 = vsub.s32 0, %v77
    %v87 = vsel %vm85, %v86, %v77
    %v88 = vshrl.u32 %v87, 1
    %v89 = vand.u32 %v87, 1
    %v90 = vsub.s32 0, %v89
    %v91 = vsel %vm85, %v90, %v89
    %vm92 = vcmp.ne.s32.totalorder %v84, 0
    %vm93 = vcmp.ne.s32.totalorder %v91, 0
    %vm94 = vcmp.lt.s32.totalorder %v84, 0
    %vm95 = vcmp.lt.s32.totalorder %v91, 0
    %vm96 = vmand %vm94, %vm92
    %vm97 = vmand %vm95, %vm93
    %v98 = vadd.s32 %v84, 2
    %v99 = vadd.s32 %v91, 2
    %v100 = vsel %vm96, %v98, %v84
    %v101 = vsel %vm97, %v99, %v91
    %v102 = vlaneseq
    %v103 = vand.u32 %v102, 127
    %vm104 = vcmp.lt.s32.totalorder %v103, 0
    %v105 = vsub.s32 0, %v103
    %v106 = vsel %vm104, %v105, %v103
    %v107 = vshrl.u32 %v106, 1
    %v108 = vand.u32 %v106, 1
    %v109 = vsub.s32 0, %v108
    %v110 = vsel %vm104, %v109, %v108
    %vm111 = vcmp.ne.s32.totalorder %v110, 0
    %vm112 = vcmp.lt.s32.totalorder %v110, 0
    %vm113 = vmand %vm112, %vm111
    %v114 = vadd.s32 %v110, 2
    %v115 = vsel %vm113, %v114, %v110
    %vm116 = vcmp.eq.s32.totalorder %v100, %v115
    %vm117 = vcmp.eq.s32.totalorder %v101, %v115
    %v118 = vld [vmem:[%s2] sm:$0xff]
    %v119 = vld [vmem:[%s2 + $0x8] sm:$0xff]
    %v120 = vld [vmem:[%s2 + $0x10] sm:$0xff]
    %v121 = vld [vmem:[%s2 + $0x18] sm:$0xff]
    %v122 = vld [vmem:[%s3] sm:$0xff]
    %v123 = vld [vmem:[%s3 + $0x8] sm:$0xff]
    %v124 = vld [vmem:[%s3 + $0x10] sm:$0xff]
    %v125 = vld [vmem:[%s3 + $0x18] sm:$0xff]
    %v126 = vld [vmem:[%s4] sm:$0xff]
    %v127 = vld [vmem:[%s4 + $0x8] sm:$0xff]
    %v128 = vld [vmem:[%s4 + $0x10] sm:$0xff]
    %v129 = vld [vmem:[%s4 + $0x18] sm:$0xff]
    %v130 = vld [vmem:[#allocation5] sm:$0xff]
    %v131 = vld [vmem:[#allocation5 + $0x8] sm:$0xff]
    %v132 = vld [vmem:[#allocation5 + $0x10] sm:$0xff]
    %v133 = vld [vmem:[#allocation5 + $0x18] sm:$0xff]
    %v134 = vld [vmem:[%s6] sm:$0xff]
    %v135 = vld [vmem:[%s6 + $0x8] sm:$0xff]
    %v136 = vld [vmem:[%s6 + $0x10] sm:$0xff]
    %v137 = vld [vmem:[%s6 + $0x18] sm:$0xff]
    %v138 = vld [vmem:[%s6 + $0x20] sm:$0xff]
    %v139 = vld [vmem:[%s6 + $0x28] sm:$0xff]
    %v140 = vld [vmem:[%s6 + $0x30] sm:$0xff]
    %v141 = vld [vmem:[%s6 + $0x38] sm:$0xff]
    %v142 = vld [vmem:[%s7] sm:$0x1]
    %v143 = vld [vmem:[%s8] sm:$0x1]
    %v144 = vld [vmem:[%s9] sm:$0x7f]
    %v145 = vadd.f32 %v71, %v73
    %v146 = vadd.f32 %v72, %v74
    %v148 = vperm.slane %v142, 0
    %vm150 = vcmask 261120
    %v152 = vsel %vm150, %v145, 0
    %v155 = vsel %vm150, %v146, 0
    %157 = vmatpush.msra.mxu0 0.0
    %158 = vmatpush.msra.mxu0 0.0
    %159 = vmatpush.msra.mxu0 0.0
    %160 = vmatpush.msra.mxu0 0.0
    %161 = vmatpush.msra.mxu0 0.0
    %162 = vmatpush.msra.mxu0 0.0
    %163 = vmatpush.msra.mxu0 0.0
    %164 = vmatpush.msra.mxu0 0.0
    %165 = vmatpush.msra.mxu0 0.0
    %166 = vmatpush.msra.mxu0 0.0
    %167 = vmatpush.msra.mxu0 0.0
    %168 = vmatpush.msra.mxu0 0.0
    %169 = vmatpush.msra.mxu0 %v121
    %170 = vmatpush.msra.mxu0 %v120
    %171 = vmatpush.msra.mxu0 %v119
    %172 = vmatpush.msra.mxu0 %v118
    %173 = vmatmul.f32.gmra.mxu0 %v152
    %v174 = vpop.f32.mrf.mxu0
    %v175 = vadd.f32 %v148, %v174
    %176 = vmatmul.f32.gmra.mxu0 %v155
    %v177 = vpop.f32.mrf.mxu0
    %v178 = vadd.f32 %v148, %v177
    %179 = vdwg.mxu0
    %v180 = vperm.slane %v144, 0
    %v182 = vsel %vm150, %v71, 0
    %v185 = vsel %vm150, %v72, 0
    %187 = vmatpush.msra.mxu0 0.0
    %188 = vmatpush.msra.mxu0 0.0
    %189 = vmatpush.msra.mxu0 0.0
    %190 = vmatpush.msra.mxu0 0.0
    %191 = vmatpush.msra.mxu0 0.0
    %192 = vmatpush.msra.mxu0 0.0
    %193 = vmatpush.msra.mxu0 0.0
    %194 = vmatpush.msra.mxu0 0.0
    %195 = vmatpush.msra.mxu0 0.0
    %196 = vmatpush.msra.mxu0 0.0
    %197 = vmatpush.msra.mxu0 0.0
    %198 = vmatpush.msra.mxu0 0.0
    %199 = vmatpush.msra.mxu0 %v125
    %200 = vmatpush.msra.mxu0 %v124
    %201 = vmatpush.msra.mxu0 %v123
    %202 = vmatpush.msra.mxu0 %v122
    %203 = vmatmul.f32.gmra.mxu0 %v182
    %v204 = vpop.f32.mrf.mxu0
    %v205 = vadd.f32 %v180, %v204
    %206 = vmatmul.f32.gmra.mxu0 %v185
    %v207 = vpop.f32.mrf.mxu0
    %v208 = vadd.f32 %v180, %v207
    %209 = vdwg.mxu0
    %v210 = vmul.f32 %v175, 0.35355338
    %v211 = vmul.f32 %v178, 0.35355338
    %214 = vrot.lane.b32.xlu0 %v175, 96
    %v215 = vpop.permute.xlu0 %214
    %216 = vrot.lane.b32.xlu0 %v178, 96
    %v217 = vpop.permute.xlu0 %216
    %vm218 = vcmask 64512
    %v220 = vsel %vm218, %v210, 0
    %v223 = vsel %vm218, %v211, 0
    %v225 = vsel %vm218, %v215, 0
    %v227 = vsel %vm218, %v217, 0
    %229 = vmatpush.xpose.msra.mxu0 0.0
    %230 = vmatpush.xpose.msra.mxu0 0.0
    %231 = vmatpush.xpose.msra.mxu0 0.0
    %232 = vmatpush.xpose.msra.mxu0 0.0
    %233 = vmatpush.xpose.msra.mxu0 0.0
    %234 = vmatpush.xpose.msra.mxu0 0.0
    %235 = vmatpush.xpose.msra.mxu0 0.0
    %236 = vmatpush.xpose.msra.mxu0 0.0
    %237 = vmatpush.xpose.msra.mxu0 0.0
    %238 = vmatpush.xpose.msra.mxu0 0.0
    %239 = vmatpush.xpose.msra.mxu0 0.0
    %240 = vmatpush.xpose.msra.mxu0 0.0
    %241 = vmatpush.xpose.msra.mxu0 0.0
    %242 = vmatpush.xpose.msra.mxu0 0.0
    %243 = vmatpush.xpose.msra.mxu0 %v227
    %244 = vmatpush.xpose.msra.mxu0 %v225
    %245 = vmatmul.f32.gmra.mxu0 %v220
    %v246 = vpop.f32.mrf.mxu0
    %v247 = vadd.f32 0.0, %v246
    %248 = vmatmul.f32.gmra.mxu0 %v223
    %v249 = vpop.f32.mrf.mxu0
    %v250 = vadd.f32 0.0, %v249
    %251 = vdwg.mxu0
    %v252 = vsel %vm116, %v247, -1e+30
    %v253 = vsel %vm117, %v250, -1e+30
    %vm254 = vcmask 130048
    %v255 = vsel %vm254, %v252, -inf
    %256 = vmax.xlane.f32.xlu0 %v255
    %v257 = vpop.xlane.xlu0 %256
    %v258 = vsel %vm254, %v253, -inf
    %259 = vmax.xlane.f32.xlu0 %v258
    %v260 = vpop.xlane.xlu0 %259
    %v261 = vsub.f32 %v252, %v257
    %v262 = vsub.f32 %v253, %v260
    %v263 = vmul.f32 %v261, 1.442695
    %v264 = vpow.pop %v263
    %v265 = vmul.f32 %v262, 1.442695
    %v266 = vpow.pop %v265
    %v267 = vsel %vm254, %v264, 0.0
    %268 = vadd.xlane.f32.xlu0 %v267
    %v269 = vpop.xlane.xlu0 %268
    %v270 = vsel %vm254, %v266, 0.0
    %271 = vadd.xlane.f32.xlu0 %v270
    %v272 = vpop.xlane.xlu0 %271
    %v273 = vrcp.pop %v269
    %v274 = vrcp.pop %v272
    %v275 = vmul.f32 %v264, %v273
    %v276 = vmul.f32 %v266, %v274
    %v278 = vsel %vm254, %v275, 0
    %v281 = vsel %vm254, %v276, 0
    %283 = vmatpush.msra.mxu0 0.0
    %284 = vmatpush.msra.mxu0 0.0
    %285 = vmatpush.msra.mxu0 0.0
    %286 = vmatpush.msra.mxu0 0.0
    %287 = vmatpush.msra.mxu0 0.0
    %288 = vmatpush.msra.mxu0 0.0
    %289 = vmatpush.msra.mxu0 0.0
    %290 = vmatpush.msra.mxu0 0.0
    %291 = vmatpush.msra.mxu0 0.0
    %292 = vmatpush.msra.mxu0 0.0
    %293 = vmatpush.msra.mxu0 0.0
    %294 = vmatpush.msra.mxu0 0.0
    %295 = vmatpush.msra.mxu0 0.0
    %296 = vmatpush.msra.mxu0 0.0
    %297 = vmatpush.msra.mxu0 %v208
    %298 = vmatpush.msra.mxu0 %v205
    %299 = vmatmul.f32.gmra.mxu0 %v278
    %v300 = vpop.f32.mrf.mxu0
    %v301 = vadd.f32 0.0, %v300
    %302 = vmatmul.f32.gmra.mxu0 %v281
    %v303 = vpop.f32.mrf.mxu0
    %v304 = vadd.f32 0.0, %v303
    %305 = vdwg.mxu0
    %306 = vrot.lane.b32.xlu0 %v210, 120
    %v307 = vpop.permute.xlu0 %306
    %308 = vrot.lane.b32.xlu0 %v211, 120
    %v309 = vpop.permute.xlu0 %308
    %310 = vrot.lane.b32.xlu0 %v175, 88
    %v311 = vpop.permute.xlu0 %310
    %312 = vrot.lane.b32.xlu0 %v178, 88
    %v313 = vpop.permute.xlu0 %312
    %v314 = vsel %vm218, %v307, 0
    %v316 = vsel %vm218, %v309, 0
    %v318 = vsel %vm218, %v311, 0
    %v320 = vsel %vm218, %v313, 0
    %322 = vmatpush.xpose.msra.mxu0 0.0
    %323 = vmatpush.xpose.msra.mxu0 0.0
    %324 = vmatpush.xpose.msra.mxu0 0.0
    %325 = vmatpush.xpose.msra.mxu0 0.0
    %326 = vmatpush.xpose.msra.mxu0 0.0
    %327 = vmatpush.xpose.msra.mxu0 0.0
    %328 = vmatpush.xpose.msra.mxu0 0.0
    %329 = vmatpush.xpose.msra.mxu0 0.0
    %330 = vmatpush.xpose.msra.mxu0 0.0
    %331 = vmatpush.xpose.msra.mxu0 0.0
    %332 = vmatpush.xpose.msra.mxu0 0.0
    %333 = vmatpush.xpose.msra.mxu0 0.0
    %334 = vmatpush.xpose.msra.mxu0 0.0
    %335 = vmatpush.xpose.msra.mxu0 0.0
    %336 = vmatpush.xpose.msra.mxu0 %v320
    %337 = vmatpush.xpose.msra.mxu0 %v318
    %338 = vmatmul.f32.gmra.mxu0 %v314
    %v339 = vpop.f32.mrf.mxu0
    %v340 = vadd.f32 0.0, %v339
    %341 = vmatmul.f32.gmra.mxu0 %v316
    %v342 = vpop.f32.mrf.mxu0
    %v343 = vadd.f32 0.0, %v342
    %344 = vdwg.mxu0
    %v345 = vsel %vm116, %v340, -1e+30
    %v346 = vsel %vm117, %v343, -1e+30
    %v347 = vsel %vm254, %v345, -inf
    %348 = vmax.xlane.f32.xlu0 %v347
    %v349 = vpop.xlane.xlu0 %348
    %v350 = vsel %vm254, %v346, -inf
    %351 = vmax.xlane.f32.xlu0 %v350
    %v352 = vpop.xlane.xlu0 %351
    %v353 = vsub.f32 %v345, %v349
    %v354 = vsub.f32 %v346, %v352
    %v355 = vmul.f32 %v353, 1.442695
    %v356 = vpow.pop %v355
    %v357 = vmul.f32 %v354, 1.442695
    %v358 = vpow.pop %v357
    %v359 = vsel %vm254, %v356, 0.0
    %360 = vadd.xlane.f32.xlu0 %v359
    %v361 = vpop.xlane.xlu0 %360
    %v362 = vsel %vm254, %v358, 0.0
    %363 = vadd.xlane.f32.xlu0 %v362
    %v364 = vpop.xlane.xlu0 %363
    %v365 = vrcp.pop %v361
    %v366 = vrcp.pop %v364
    %v367 = vmul.f32 %v356, %v365
    %v368 = vmul.f32 %v358, %v366
    %371 = vrot.lane.b32.xlu0 %v205, 120
    %v372 = vpop.permute.xlu0 %371
    %373 = vrot.lane.b32.xlu0 %v208, 120
    %v374 = vpop.permute.xlu0 %373
    %v378 = vsel %vm254, %v367, 0
    %v381 = vsel %vm254, %v368, 0
    %383 = vmatpush.msra.mxu0 0.0
    %384 = vmatpush.msra.mxu0 0.0
    %385 = vmatpush.msra.mxu0 0.0
    %386 = vmatpush.msra.mxu0 0.0
    %387 = vmatpush.msra.mxu0 0.0
    %388 = vmatpush.msra.mxu0 0.0
    %389 = vmatpush.msra.mxu0 0.0
    %390 = vmatpush.msra.mxu0 0.0
    %391 = vmatpush.msra.mxu0 0.0
    %392 = vmatpush.msra.mxu0 0.0
    %393 = vmatpush.msra.mxu0 0.0
    %394 = vmatpush.msra.mxu0 0.0
    %395 = vmatpush.msra.mxu0 0.0
    %396 = vmatpush.msra.mxu0 0.0
    %397 = vmatpush.msra.mxu0 %v374
    %398 = vmatpush.msra.mxu0 %v372
    %399 = vmatmul.f32.gmra.mxu0 %v378
    %v400 = vpop.f32.mrf.mxu0
    %v401 = vadd.f32 0.0, %v400
    %402 = vmatmul.f32.gmra.mxu0 %v381
    %v403 = vpop.f32.mrf.mxu0
    %v404 = vadd.f32 0.0, %v403
    %405 = vdwg.mxu0
    %406 = vrot.lane.b32.xlu0 %v210, 112
    %v407 = vpop.permute.xlu0 %406
    %408 = vrot.lane.b32.xlu0 %v211, 112
    %v409 = vpop.permute.xlu0 %408
    %410 = vrot.lane.b32.xlu0 %v175, 80
    %v411 = vpop.permute.xlu0 %410
    %412 = vrot.lane.b32.xlu0 %v178, 80
    %v413 = vpop.permute.xlu0 %412
    %v414 = vsel %vm218, %v407, 0
    %v416 = vsel %vm218, %v409, 0
    %v418 = vsel %vm218, %v411, 0
    %v420 = vsel %vm218, %v413, 0
    %422 = vmatpush.xpose.msra.mxu0 0.0
    %423 = vmatpush.xpose.msra.mxu0 0.0
    %424 = vmatpush.xpose.msra.mxu0 0.0
    %425 = vmatpush.xpose.msra.mxu0 0.0
    %426 = vmatpush.xpose.msra.mxu0 0.0
    %427 = vmatpush.xpose.msra.mxu0 0.0
    %428 = vmatpush.xpose.msra.mxu0 0.0
    %429 = vmatpush.xpose.msra.mxu0 0.0
    %430 = vmatpush.xpose.msra.mxu0 0.0
    %431 = vmatpush.xpose.msra.mxu0 0.0
    %432 = vmatpush.xpose.msra.mxu0 0.0
    %433 = vmatpush.xpose.msra.mxu0 0.0
    %434 = vmatpush.xpose.msra.mxu0 0.0
    %435 = vmatpush.xpose.msra.mxu0 0.0
    %436 = vmatpush.xpose.msra.mxu0 %v420
    %437 = vmatpush.xpose.msra.mxu0 %v418
    %438 = vmatmul.f32.gmra.mxu0 %v414
    %v439 = vpop.f32.mrf.mxu0
    %v440 = vadd.f32 0.0, %v439
    %441 = vmatmul.f32.gmra.mxu0 %v416
    %v442 = vpop.f32.mrf.mxu0
    %v443 = vadd.f32 0.0, %v442
    %444 = vdwg.mxu0
    %v445 = vsel %vm116, %v440, -1e+30
    %v446 = vsel %vm117, %v443, -1e+30
    %v447 = vsel %vm254, %v445, -inf
    %448 = vmax.xlane.f32.xlu0 %v447
    %v449 = vpop.xlane.xlu0 %448
    %v450 = vsel %vm254, %v446, -inf
    %451 = vmax.xlane.f32.xlu0 %v450
    %v452 = vpop.xlane.xlu0 %451
    %v453 = vsub.f32 %v445, %v449
    %v454 = vsub.f32 %v446, %v452
    %v455 = vmul.f32 %v453, 1.442695
    %v456 = vpow.pop %v455
    %v457 = vmul.f32 %v454, 1.442695
    %v458 = vpow.pop %v457
    %v459 = vsel %vm254, %v456, 0.0
    %460 = vadd.xlane.f32.xlu0 %v459
    %v461 = vpop.xlane.xlu0 %460
    %v462 = vsel %vm254, %v458, 0.0
    %463 = vadd.xlane.f32.xlu0 %v462
    %v464 = vpop.xlane.xlu0 %463
    %v465 = vrcp.pop %v461
    %v466 = vrcp.pop %v464
    %v467 = vmul.f32 %v456, %v465
    %v468 = vmul.f32 %v458, %v466
    %469 = vrot.lane.b32.xlu0 %v205, 112
    %v470 = vpop.permute.xlu0 %469
    %471 = vrot.lane.b32.xlu0 %v208, 112
    %v472 = vpop.permute.xlu0 %471
    %v476 = vsel %vm254, %v467, 0
    %v479 = vsel %vm254, %v468, 0
    %481 = vmatpush.msra.mxu0 0.0
    %482 = vmatpush.msra.mxu0 0.0
    %483 = vmatpush.msra.mxu0 0.0
    %484 = vmatpush.msra.mxu0 0.0
    %485 = vmatpush.msra.mxu0 0.0
    %486 = vmatpush.msra.mxu0 0.0
    %487 = vmatpush.msra.mxu0 0.0
    %488 = vmatpush.msra.mxu0 0.0
    %489 = vmatpush.msra.mxu0 0.0
    %490 = vmatpush.msra.mxu0 0.0
    %491 = vmatpush.msra.mxu0 0.0
    %492 = vmatpush.msra.mxu0 0.0
    %493 = vmatpush.msra.mxu0 0.0
    %494 = vmatpush.msra.mxu0 0.0
    %495 = vmatpush.msra.mxu0 %v472
    %496 = vmatpush.msra.mxu0 %v470
    %497 = vmatmul.f32.gmra.mxu0 %v476
    %v498 = vpop.f32.mrf.mxu0
    %v499 = vadd.f32 0.0, %v498
    %500 = vmatmul.f32.gmra.mxu0 %v479
    %v501 = vpop.f32.mrf.mxu0
    %v502 = vadd.f32 0.0, %v501
    %503 = vdwg.mxu0
    %504 = vrot.lane.b32.xlu0 %v210, 104
    %v505 = vpop.permute.xlu0 %504
    %506 = vrot.lane.b32.xlu0 %v211, 104
    %v507 = vpop.permute.xlu0 %506
    %508 = vrot.lane.b32.xlu0 %v175, 72
    %v509 = vpop.permute.xlu0 %508
    %510 = vrot.lane.b32.xlu0 %v178, 72
    %v511 = vpop.permute.xlu0 %510
    %v512 = vsel %vm218, %v505, 0
    %v514 = vsel %vm218, %v507, 0
    %v516 = vsel %vm218, %v509, 0
    %v518 = vsel %vm218, %v511, 0
    %520 = vmatpush.xpose.msra.mxu0 0.0
    %521 = vmatpush.xpose.msra.mxu0 0.0
    %522 = vmatpush.xpose.msra.mxu0 0.0
    %523 = vmatpush.xpose.msra.mxu0 0.0
    %524 = vmatpush.xpose.msra.mxu0 0.0
    %525 = vmatpush.xpose.msra.mxu0 0.0
    %526 = vmatpush.xpose.msra.mxu0 0.0
    %527 = vmatpush.xpose.msra.mxu0 0.0
    %528 = vmatpush.xpose.msra.mxu0 0.0
    %529 = vmatpush.xpose.msra.mxu0 0.0
    %530 = vmatpush.xpose.msra.mxu0 0.0
    %531 = vmatpush.xpose.msra.mxu0 0.0
    %532 = vmatpush.xpose.msra.mxu0 0.0
    %533 = vmatpush.xpose.msra.mxu0 0.0
    %534 = vmatpush.xpose.msra.mxu0 %v518
    %535 = vmatpush.xpose.msra.mxu0 %v516
    %536 = vmatmul.f32.gmra.mxu0 %v512
    %v537 = vpop.f32.mrf.mxu0
    %v538 = vadd.f32 0.0, %v537
    %539 = vmatmul.f32.gmra.mxu0 %v514
    %v540 = vpop.f32.mrf.mxu0
    %v541 = vadd.f32 0.0, %v540
    %542 = vdwg.mxu0
    %v543 = vsel %vm116, %v538, -1e+30
    %v544 = vsel %vm117, %v541, -1e+30
    %v545 = vsel %vm254, %v543, -inf
    %546 = vmax.xlane.f32.xlu0 %v545
    %v547 = vpop.xlane.xlu0 %546
    %v548 = vsel %vm254, %v544, -inf
    %549 = vmax.xlane.f32.xlu0 %v548
    %v550 = vpop.xlane.xlu0 %549
    %v551 = vsub.f32 %v543, %v547
    %v552 = vsub.f32 %v544, %v550
    %v553 = vmul.f32 %v551, 1.442695
    %v554 = vpow.pop %v553
    %v555 = vmul.f32 %v552, 1.442695
    %v556 = vpow.pop %v555
    %v557 = vsel %vm254, %v554, 0.0
    %558 = vadd.xlane.f32.xlu0 %v557
    %v559 = vpop.xlane.xlu0 %558
    %v560 = vsel %vm254, %v556, 0.0
    %561 = vadd.xlane.f32.xlu0 %v560
    %v562 = vpop.xlane.xlu0 %561
    %v563 = vrcp.pop %v559
    %v564 = vrcp.pop %v562
    %v565 = vmul.f32 %v554, %v563
    %v566 = vmul.f32 %v556, %v564
    %567 = vrot.lane.b32.xlu0 %v205, 104
    %v568 = vpop.permute.xlu0 %567
    %569 = vrot.lane.b32.xlu0 %v208, 104
    %v570 = vpop.permute.xlu0 %569
    %v574 = vsel %vm254, %v565, 0
    %v577 = vsel %vm254, %v566, 0
    %579 = vmatpush.msra.mxu0 0.0
    %580 = vmatpush.msra.mxu0 0.0
    %581 = vmatpush.msra.mxu0 0.0
    %582 = vmatpush.msra.mxu0 0.0
    %583 = vmatpush.msra.mxu0 0.0
    %584 = vmatpush.msra.mxu0 0.0
    %585 = vmatpush.msra.mxu0 0.0
    %586 = vmatpush.msra.mxu0 0.0
    %587 = vmatpush.msra.mxu0 0.0
    %588 = vmatpush.msra.mxu0 0.0
    %589 = vmatpush.msra.mxu0 0.0
    %590 = vmatpush.msra.mxu0 0.0
    %591 = vmatpush.msra.mxu0 0.0
    %592 = vmatpush.msra.mxu0 0.0
    %593 = vmatpush.msra.mxu0 %v570
    %594 = vmatpush.msra.mxu0 %v568
    %595 = vmatmul.f32.gmra.mxu0 %v574
    %v596 = vpop.f32.mrf.mxu0
    %v597 = vadd.f32 0.0, %v596
    %598 = vmatmul.f32.gmra.mxu0 %v577
    %v599 = vpop.f32.mrf.mxu0
    %v600 = vadd.f32 0.0, %v599
    %601 = vdwg.mxu0
    %604 = vrot.lane.b32.xlu0 %v401, 8
    %v605 = vpop.permute.xlu0 %604
    %606 = vrot.lane.b32.xlu0 %v404, 8
    %v607 = vpop.permute.xlu0 %606
    %612 = vrot.lane.b32.xlu0 %v499, 16
    %v613 = vpop.permute.xlu0 %612
    %614 = vrot.lane.b32.xlu0 %v502, 16
    %v615 = vpop.permute.xlu0 %614
    %620 = vrot.lane.b32.xlu0 %v597, 24
    %v621 = vpop.permute.xlu0 %620
    %622 = vrot.lane.b32.xlu0 %v600, 24
    %v623 = vpop.permute.xlu0 %622
    %v626 = vsel %vm218, %v301, %v605
    %v627 = vsel %vm218, %v304, %v607
    %v628 = vsel %vm254, %v626, %v613
    %v629 = vsel %vm254, %v627, %v615
    %vm630 = vcmask 195584
    %v631 = vsel %vm630, %v628, %v621
    %v632 = vsel %vm630, %v629, %v623
    %v633 = vperm.slane %v144, 1
    %v635 = vsel %vm150, %v631, 0
    %v638 = vsel %vm150, %v632, 0
    %640 = vmatpush.msra.mxu0 0.0
    %641 = vmatpush.msra.mxu0 0.0
    %642 = vmatpush.msra.mxu0 0.0
    %643 = vmatpush.msra.mxu0 0.0
    %644 = vmatpush.msra.mxu0 0.0
    %645 = vmatpush.msra.mxu0 0.0
    %646 = vmatpush.msra.mxu0 0.0
    %647 = vmatpush.msra.mxu0 0.0
    %648 = vmatpush.msra.mxu0 0.0
    %649 = vmatpush.msra.mxu0 0.0
    %650 = vmatpush.msra.mxu0 0.0
    %651 = vmatpush.msra.mxu0 0.0
    %652 = vmatpush.msra.mxu0 %v129
    %653 = vmatpush.msra.mxu0 %v128
    %654 = vmatpush.msra.mxu0 %v127
    %655 = vmatpush.msra.mxu0 %v126
    %656 = vmatmul.f32.gmra.mxu0 %v635
    %v657 = vpop.f32.mrf.mxu0
    %v658 = vadd.f32 %v633, %v657
    %659 = vmatmul.f32.gmra.mxu0 %v638
    %v660 = vpop.f32.mrf.mxu0
    %v661 = vadd.f32 %v633, %v660
    %662 = vdwg.mxu0
    %v663 = vadd.f32 %v71, %v658
    %v664 = vadd.f32 %v72, %v661
    %v665 = vsel %vm150, %v663, 0.0
    %666 = vadd.xlane.f32.xlu0 %v665
    %v667 = vpop.xlane.xlu0 %666
    %v668 = vsel %vm150, %v664, 0.0
    %669 = vadd.xlane.f32.xlu0 %v668
    %v670 = vpop.xlane.xlu0 %669
    %v671 = vrcp.pop 32.0
    %v672 = vmul.f32 32.0, %v671
    %v673 = vsub.f32 1.0, %v672
    %v674 = vmul.f32 %v671, %v673
    %v675 = vadd.f32 %v671, %v674
    %vm676 = vweird.f32 %v671
    %v677 = vsel %vm676, %v671, %v675
    %v678 = vmul.f32 %v667, %v677
    %v679 = vmul.f32 %v670, %v677
    %v680 = vsub.f32 %v663, %v678
    %v681 = vsub.f32 %v664, %v679
    %v682 = vmul.f32 %v680, %v680
    %v683 = vmul.f32 %v681, %v681
    %v684 = vsel %vm150, %v682, 0.0
    %685 = vadd.xlane.f32.xlu0 %v684
    %v686 = vpop.xlane.xlu0 %685
    %v687 = vsel %vm150, %v683, 0.0
    %688 = vadd.xlane.f32.xlu0 %v687
    %v689 = vpop.xlane.xlu0 %688
    %v690 = vmul.f32 %v686, %v677
    %v691 = vmul.f32 %v689, %v677
    %v692 = vadd.f32 %v690, 1e-05
    %v693 = vadd.f32 %v691, 1e-05
    %v694 = vrsqrt.pop %v692
    %v695 = vmul.f32 %v694, %v692
    %v696 = vmul.f32 %v695, %v694
    %v697 = vmul.f32 0.5, %v696
    %v698 = vsub.f32 1.5, %v697
    %v699 = vmul.f32 %v694, %v698
    %vm700 = vweird.f32 %v692
    %vm701 = vweird.f32 %v694
    %vm702 = vmor %vm700, %vm701
    %v703 = vsel %vm702, %v694, %v699
    %v704 = vrsqrt.pop %v693
    %v705 = vmul.f32 %v704, %v693
    %v706 = vmul.f32 %v705, %v704
    %v707 = vmul.f32 0.5, %v706
    %v708 = vsub.f32 1.5, %v707
    %v709 = vmul.f32 %v704, %v708
    %vm710 = vweird.f32 %v693
    %vm711 = vweird.f32 %v704
    %vm712 = vmor %vm710, %vm711
    %v713 = vsel %vm712, %v704, %v709
    %v714 = vmul.f32 %v680, %v703
    %v715 = vmul.f32 %v681, %v713
    %v716 = vperm.slane %v144, 3
    %v717 = vmul.f32 %v714, %v716
    %v718 = vmul.f32 %v715, %v716
    %v719 = vperm.slane %v144, 4
    %v720 = vadd.f32 %v717, %v719
    %v721 = vadd.f32 %v718, %v719
    %v723 = vperm.slane %v143, 0
    %v726 = vsel %vm150, %v720, 0
    %v729 = vsel %vm150, %v721, 0
    %731 = vmatpush.msra.mxu0 0.0
    %732 = vmatpush.msra.mxu0 0.0
    %733 = vmatpush.msra.mxu0 0.0
    %734 = vmatpush.msra.mxu0 0.0
    %735 = vmatpush.msra.mxu0 0.0
    %736 = vmatpush.msra.mxu0 0.0
    %737 = vmatpush.msra.mxu0 0.0
    %738 = vmatpush.msra.mxu0 0.0
    %739 = vmatpush.msra.mxu0 0.0
    %740 = vmatpush.msra.mxu0 0.0
    %741 = vmatpush.msra.mxu0 0.0
    %742 = vmatpush.msra.mxu0 0.0
    %743 = vmatpush.msra.mxu0 %v133
    %744 = vmatpush.msra.mxu0 %v132
    %745 = vmatpush.msra.mxu0 %v131
    %746 = vmatpush.msra.mxu0 %v130
    %747 = vmatmul.f32.gmra.mxu0 %v726
    %v748 = vpop.f32.mrf.mxu0
    %v749 = vadd.f32 %v723, %v748
    %750 = vmatmul.f32.gmra.mxu0 %v729
    %v751 = vpop.f32.mrf.mxu0
    %v752 = vadd.f32 %v723, %v751
    %753 = vdwg.mxu0
    %v754 = vmax.f32 %v749, 0.0
    %v755 = vmax.f32 %v752, 0.0
    %v756 = vperm.slane %v144, 2
    %vm757 = vcmask 523264
    %v759 = vsel %vm757, %v754, 0
    %v762 = vsel %vm757, %v755, 0
    %764 = vmatpush.msra.mxu0 0.0
    %765 = vmatpush.msra.mxu0 0.0
    %766 = vmatpush.msra.mxu0 0.0
    %767 = vmatpush.msra.mxu0 0.0
    %768 = vmatpush.msra.mxu0 0.0
    %769 = vmatpush.msra.mxu0 0.0
    %770 = vmatpush.msra.mxu0 0.0
    %771 = vmatpush.msra.mxu0 0.0
    %772 = vmatpush.msra.mxu0 %v141
    %773 = vmatpush.msra.mxu0 %v140
    %774 = vmatpush.msra.mxu0 %v139
    %775 = vmatpush.msra.mxu0 %v138
    %776 = vmatpush.msra.mxu0 %v137
    %777 = vmatpush.msra.mxu0 %v136
    %778 = vmatpush.msra.mxu0 %v135
    %779 = vmatpush.msra.mxu0 %v134
    %780 = vmatmul.f32.gmra.mxu0 %v759
    %v781 = vpop.f32.mrf.mxu0
    %v782 = vadd.f32 %v756, %v781
    %783 = vmatmul.f32.gmra.mxu0 %v762
    %v784 = vpop.f32.mrf.mxu0
    %v785 = vadd.f32 %v756, %v784
    %786 = vdwg.mxu0
    %v787 = vadd.f32 %v720, %v782
    %v788 = vadd.f32 %v721, %v785
    %v789 = vsel %vm150, %v787, 0.0
    %790 = vadd.xlane.f32.xlu0 %v789
    %v791 = vpop.xlane.xlu0 %790
    %v792 = vsel %vm150, %v788, 0.0
    %793 = vadd.xlane.f32.xlu0 %v792
    %v794 = vpop.xlane.xlu0 %793
    %v795 = vmul.f32 %v791, %v677
    %v796 = vmul.f32 %v794, %v677
    %v797 = vsub.f32 %v787, %v795
    %v798 = vsub.f32 %v788, %v796
    %v799 = vmul.f32 %v797, %v797
    %v800 = vmul.f32 %v798, %v798
    %v801 = vsel %vm150, %v799, 0.0
    %802 = vadd.xlane.f32.xlu0 %v801
    %v803 = vpop.xlane.xlu0 %802
    %v804 = vsel %vm150, %v800, 0.0
    %805 = vadd.xlane.f32.xlu0 %v804
    %v806 = vpop.xlane.xlu0 %805
    %v807 = vmul.f32 %v803, %v677
    %v808 = vmul.f32 %v806, %v677
    %v809 = vadd.f32 %v807, 1e-05
    %v810 = vadd.f32 %v808, 1e-05
    %v811 = vrsqrt.pop %v809
    %v812 = vmul.f32 %v811, %v809
    %v813 = vmul.f32 %v812, %v811
    %v814 = vmul.f32 0.5, %v813
    %v815 = vsub.f32 1.5, %v814
    %v816 = vmul.f32 %v811, %v815
    %vm817 = vweird.f32 %v809
    %vm818 = vweird.f32 %v811
    %vm819 = vmor %vm817, %vm818
    %v820 = vsel %vm819, %v811, %v816
    %v821 = vrsqrt.pop %v810
    %v822 = vmul.f32 %v821, %v810
    %v823 = vmul.f32 %v822, %v821
    %v824 = vmul.f32 0.5, %v823
    %v825 = vsub.f32 1.5, %v824
    %v826 = vmul.f32 %v821, %v825
    %vm827 = vweird.f32 %v810
    %vm828 = vweird.f32 %v821
    %vm829 = vmor %vm827, %vm828
    %v830 = vsel %vm829, %v821, %v826
    %v831 = vmul.f32 %v797, %v820
    %v832 = vmul.f32 %v798, %v830
    %v833 = vperm.slane %v144, 5
    %v834 = vmul.f32 %v831, %v833
    %v835 = vmul.f32 %v832, %v833
    %v836 = vperm.slane %v144, 6
    %v837 = vadd.f32 %v834, %v836
    %v838 = vadd.f32 %v835, %v836
    %s839 = scalar_lea.vmem %s2, 32
    %v840 = vld [vmem:[%s839] sm:$0xff]
    %v841 = vld [vmem:[%s839 + $0x8] sm:$0xff]
    %v842 = vld [vmem:[%s839 + $0x10] sm:$0xff]
    %v843 = vld [vmem:[%s839 + $0x18] sm:$0xff]
    %s844 = scalar_lea.vmem %s3, 32
    %v845 = vld [vmem:[%s844] sm:$0xff]
    %v846 = vld [vmem:[%s844 + $0x8] sm:$0xff]
    %v847 = vld [vmem:[%s844 + $0x10] sm:$0xff]
    %v848 = vld [vmem:[%s844 + $0x18] sm:$0xff]
    %s849 = scalar_lea.vmem %s4, 32
    %v850 = vld [vmem:[%s849] sm:$0xff]
    %v851 = vld [vmem:[%s849 + $0x8] sm:$0xff]
    %v852 = vld [vmem:[%s849 + $0x10] sm:$0xff]
    %v853 = vld [vmem:[%s849 + $0x18] sm:$0xff]
    %s854 = scalar_lea.vmem [#allocation5], 32
    %v855 = vld [vmem:[%s854] sm:$0xff]
    %v856 = vld [vmem:[%s854 + $0x8] sm:$0xff]
    %v857 = vld [vmem:[%s854 + $0x10] sm:$0xff]
    %v858 = vld [vmem:[%s854 + $0x18] sm:$0xff]
    %s859 = scalar_lea.vmem %s6, 64
    %v860 = vld [vmem:[%s859] sm:$0xff]
    %v861 = vld [vmem:[%s859 + $0x8] sm:$0xff]
    %v862 = vld [vmem:[%s859 + $0x10] sm:$0xff]
    %v863 = vld [vmem:[%s859 + $0x18] sm:$0xff]
    %v864 = vld [vmem:[%s859 + $0x20] sm:$0xff]
    %v865 = vld [vmem:[%s859 + $0x28] sm:$0xff]
    %v866 = vld [vmem:[%s859 + $0x30] sm:$0xff]
    %v867 = vld [vmem:[%s859 + $0x38] sm:$0xff]
    %s868 = scalar_lea.vmem %s7, 1
    %v869 = vld [vmem:[%s868] sm:$0x1]
    %s870 = scalar_lea.vmem %s8, 1
    %v871 = vld [vmem:[%s870] sm:$0x1]
    %s872 = scalar_lea.vmem %s9, 8
    %v873 = vld [vmem:[%s872] sm:$0x7f]
    %v874 = vadd.f32 %v837, %v73
    %v875 = vadd.f32 %v838, %v74
    %v877 = vperm.slane %v869, 0
    %v880 = vsel %vm150, %v874, 0
    %v883 = vsel %vm150, %v875, 0
    %885 = vmatpush.msra.mxu0 0.0
    %886 = vmatpush.msra.mxu0 0.0
    %887 = vmatpush.msra.mxu0 0.0
    %888 = vmatpush.msra.mxu0 0.0
    %889 = vmatpush.msra.mxu0 0.0
    %890 = vmatpush.msra.mxu0 0.0
    %891 = vmatpush.msra.mxu0 0.0
    %892 = vmatpush.msra.mxu0 0.0
    %893 = vmatpush.msra.mxu0 0.0
    %894 = vmatpush.msra.mxu0 0.0
    %895 = vmatpush.msra.mxu0 0.0
    %896 = vmatpush.msra.mxu0 0.0
    %897 = vmatpush.msra.mxu0 %v843
    %898 = vmatpush.msra.mxu0 %v842
    %899 = vmatpush.msra.mxu0 %v841
    %900 = vmatpush.msra.mxu0 %v840
    %901 = vmatmul.f32.gmra.mxu0 %v880
    %v902 = vpop.f32.mrf.mxu0
    %v903 = vadd.f32 %v877, %v902
    %904 = vmatmul.f32.gmra.mxu0 %v883
    %v905 = vpop.f32.mrf.mxu0
    %v906 = vadd.f32 %v877, %v905
    %907 = vdwg.mxu0
    %v908 = vperm.slane %v873, 0
    %v910 = vsel %vm150, %v837, 0
    %v913 = vsel %vm150, %v838, 0
    %915 = vmatpush.msra.mxu0 0.0
    %916 = vmatpush.msra.mxu0 0.0
    %917 = vmatpush.msra.mxu0 0.0
    %918 = vmatpush.msra.mxu0 0.0
    %919 = vmatpush.msra.mxu0 0.0
    %920 = vmatpush.msra.mxu0 0.0
    %921 = vmatpush.msra.mxu0 0.0
    %922 = vmatpush.msra.mxu0 0.0
    %923 = vmatpush.msra.mxu0 0.0
    %924 = vmatpush.msra.mxu0 0.0
    %925 = vmatpush.msra.mxu0 0.0
    %926 = vmatpush.msra.mxu0 0.0
    %927 = vmatpush.msra.mxu0 %v848
    %928 = vmatpush.msra.mxu0 %v847
    %929 = vmatpush.msra.mxu0 %v846
    %930 = vmatpush.msra.mxu0 %v845
    %931 = vmatmul.f32.gmra.mxu0 %v910
    %v932 = vpop.f32.mrf.mxu0
    %v933 = vadd.f32 %v908, %v932
    %934 = vmatmul.f32.gmra.mxu0 %v913
    %v935 = vpop.f32.mrf.mxu0
    %v936 = vadd.f32 %v908, %v935
    %937 = vdwg.mxu0
    %v938 = vmul.f32 %v903, 0.35355338
    %v939 = vmul.f32 %v906, 0.35355338
    %942 = vrot.lane.b32.xlu0 %v903, 96
    %v943 = vpop.permute.xlu0 %942
    %944 = vrot.lane.b32.xlu0 %v906, 96
    %v945 = vpop.permute.xlu0 %944
    %v947 = vsel %vm218, %v938, 0
    %v950 = vsel %vm218, %v939, 0
    %v952 = vsel %vm218, %v943, 0
    %v954 = vsel %vm218, %v945, 0
    %956 = vmatpush.xpose.msra.mxu0 0.0
    %957 = vmatpush.xpose.msra.mxu0 0.0
    %958 = vmatpush.xpose.msra.mxu0 0.0
    %959 = vmatpush.xpose.msra.mxu0 0.0
    %960 = vmatpush.xpose.msra.mxu0 0.0
    %961 = vmatpush.xpose.msra.mxu0 0.0
    %962 = vmatpush.xpose.msra.mxu0 0.0
    %963 = vmatpush.xpose.msra.mxu0 0.0
    %964 = vmatpush.xpose.msra.mxu0 0.0
    %965 = vmatpush.xpose.msra.mxu0 0.0
    %966 = vmatpush.xpose.msra.mxu0 0.0
    %967 = vmatpush.xpose.msra.mxu0 0.0
    %968 = vmatpush.xpose.msra.mxu0 0.0
    %969 = vmatpush.xpose.msra.mxu0 0.0
    %970 = vmatpush.xpose.msra.mxu0 %v954
    %971 = vmatpush.xpose.msra.mxu0 %v952
    %972 = vmatmul.f32.gmra.mxu0 %v947
    %v973 = vpop.f32.mrf.mxu0
    %v974 = vadd.f32 0.0, %v973
    %975 = vmatmul.f32.gmra.mxu0 %v950
    %v976 = vpop.f32.mrf.mxu0
    %v977 = vadd.f32 0.0, %v976
    %978 = vdwg.mxu0
    %v979 = vsel %vm116, %v974, -1e+30
    %v980 = vsel %vm117, %v977, -1e+30
    %v981 = vsel %vm254, %v979, -inf
    %982 = vmax.xlane.f32.xlu0 %v981
    %v983 = vpop.xlane.xlu0 %982
    %v984 = vsel %vm254, %v980, -inf
    %985 = vmax.xlane.f32.xlu0 %v984
    %v986 = vpop.xlane.xlu0 %985
    %v987 = vsub.f32 %v979, %v983
    %v988 = vsub.f32 %v980, %v986
    %v989 = vmul.f32 %v987, 1.442695
    %v990 = vpow.pop %v989
    %v991 = vmul.f32 %v988, 1.442695
    %v992 = vpow.pop %v991
    %v993 = vsel %vm254, %v990, 0.0
    %994 = vadd.xlane.f32.xlu0 %v993
    %v995 = vpop.xlane.xlu0 %994
    %v996 = vsel %vm254, %v992, 0.0
    %997 = vadd.xlane.f32.xlu0 %v996
    %v998 = vpop.xlane.xlu0 %997
    %v999 = vrcp.pop %v995
    %v1000 = vrcp.pop %v998
    %v1001 = vmul.f32 %v990, %v999
    %v1002 = vmul.f32 %v992, %v1000
    %v1004 = vsel %vm254, %v1001, 0
    %v1007 = vsel %vm254, %v1002, 0
    %1009 = vmatpush.msra.mxu0 0.0
    %1010 = vmatpush.msra.mxu0 0.0
    %1011 = vmatpush.msra.mxu0 0.0
    %1012 = vmatpush.msra.mxu0 0.0
    %1013 = vmatpush.msra.mxu0 0.0
    %1014 = vmatpush.msra.mxu0 0.0
    %1015 = vmatpush.msra.mxu0 0.0
    %1016 = vmatpush.msra.mxu0 0.0
    %1017 = vmatpush.msra.mxu0 0.0
    %1018 = vmatpush.msra.mxu0 0.0
    %1019 = vmatpush.msra.mxu0 0.0
    %1020 = vmatpush.msra.mxu0 0.0
    %1021 = vmatpush.msra.mxu0 0.0
    %1022 = vmatpush.msra.mxu0 0.0
    %1023 = vmatpush.msra.mxu0 %v936
    %1024 = vmatpush.msra.mxu0 %v933
    %1025 = vmatmul.f32.gmra.mxu0 %v1004
    %v1026 = vpop.f32.mrf.mxu0
    %v1027 = vadd.f32 0.0, %v1026
    %1028 = vmatmul.f32.gmra.mxu0 %v1007
    %v1029 = vpop.f32.mrf.mxu0
    %v1030 = vadd.f32 0.0, %v1029
    %1031 = vdwg.mxu0
    %1032 = vrot.lane.b32.xlu0 %v938, 120
    %v1033 = vpop.permute.xlu0 %1032
    %1034 = vrot.lane.b32.xlu0 %v939, 120
    %v1035 = vpop.permute.xlu0 %1034
    %1036 = vrot.lane.b32.xlu0 %v903, 88
    %v1037 = vpop.permute.xlu0 %1036
    %1038 = vrot.lane.b32.xlu0 %v906, 88
    %v1039 = vpop.permute.xlu0 %1038
    %v1040 = vsel %vm218, %v1033, 0
    %v1042 = vsel %vm218, %v1035, 0
    %v1044 = vsel %vm218, %v1037, 0
    %v1046 = vsel %vm218, %v1039, 0
    %1048 = vmatpush.xpose.msra.mxu0 0.0
    %1049 = vmatpush.xpose.msra.mxu0 0.0
    %1050 = vmatpush.xpose.msra.mxu0 0.0
    %1051 = vmatpush.xpose.msra.mxu0 0.0
    %1052 = vmatpush.xpose.msra.mxu0 0.0
    %1053 = vmatpush.xpose.msra.mxu0 0.0
    %1054 = vmatpush.xpose.msra.mxu0 0.0
    %1055 = vmatpush.xpose.msra.mxu0 0.0
    %1056 = vmatpush.xpose.msra.mxu0 0.0
    %1057 = vmatpush.xpose.msra.mxu0 0.0
    %1058 = vmatpush.xpose.msra.mxu0 0.0
    %1059 = vmatpush.xpose.msra.mxu0 0.0
    %1060 = vmatpush.xpose.msra.mxu0 0.0
    %1061 = vmatpush.xpose.msra.mxu0 0.0
    %1062 = vmatpush.xpose.msra.mxu0 %v1046
    %1063 = vmatpush.xpose.msra.mxu0 %v1044
    %1064 = vmatmul.f32.gmra.mxu0 %v1040
    %v1065 = vpop.f32.mrf.mxu0
    %v1066 = vadd.f32 0.0, %v1065
    %1067 = vmatmul.f32.gmra.mxu0 %v1042
    %v1068 = vpop.f32.mrf.mxu0
    %v1069 = vadd.f32 0.0, %v1068
    %1070 = vdwg.mxu0
    %v1071 = vsel %vm116, %v1066, -1e+30
    %v1072 = vsel %vm117, %v1069, -1e+30
    %v1073 = vsel %vm254, %v1071, -inf
    %1074 = vmax.xlane.f32.xlu0 %v1073
    %v1075 = vpop.xlane.xlu0 %1074
    %v1076 = vsel %vm254, %v1072, -inf
    %1077 = vmax.xlane.f32.xlu0 %v1076
    %v1078 = vpop.xlane.xlu0 %1077
    %v1079 = vsub.f32 %v1071, %v1075
    %v1080 = vsub.f32 %v1072, %v1078
    %v1081 = vmul.f32 %v1079, 1.442695
    %v1082 = vpow.pop %v1081
    %v1083 = vmul.f32 %v1080, 1.442695
    %v1084 = vpow.pop %v1083
    %v1085 = vsel %vm254, %v1082, 0.0
    %1086 = vadd.xlane.f32.xlu0 %v1085
    %v1087 = vpop.xlane.xlu0 %1086
    %v1088 = vsel %vm254, %v1084, 0.0
    %1089 = vadd.xlane.f32.xlu0 %v1088
    %v1090 = vpop.xlane.xlu0 %1089
    %v1091 = vrcp.pop %v1087
    %v1092 = vrcp.pop %v1090
    %v1093 = vmul.f32 %v1082, %v1091
    %v1094 = vmul.f32 %v1084, %v1092
    %1097 = vrot.lane.b32.xlu0 %v933, 120
    %v1098 = vpop.permute.xlu0 %1097
    %1099 = vrot.lane.b32.xlu0 %v936, 120
    %v1100 = vpop.permute.xlu0 %1099
    %v1104 = vsel %vm254, %v1093, 0
    %v1107 = vsel %vm254, %v1094, 0
    %1109 = vmatpush.msra.mxu0 0.0
    %1110 = vmatpush.msra.mxu0 0.0
    %1111 = vmatpush.msra.mxu0 0.0
    %1112 = vmatpush.msra.mxu0 0.0
    %1113 = vmatpush.msra.mxu0 0.0
    %1114 = vmatpush.msra.mxu0 0.0
    %1115 = vmatpush.msra.mxu0 0.0
    %1116 = vmatpush.msra.mxu0 0.0
    %1117 = vmatpush.msra.mxu0 0.0
    %1118 = vmatpush.msra.mxu0 0.0
    %1119 = vmatpush.msra.mxu0 0.0
    %1120 = vmatpush.msra.mxu0 0.0
    %1121 = vmatpush.msra.mxu0 0.0
    %1122 = vmatpush.msra.mxu0 0.0
    %1123 = vmatpush.msra.mxu0 %v1100
    %1124 = vmatpush.msra.mxu0 %v1098
    %1125 = vmatmul.f32.gmra.mxu0 %v1104
    %v1126 = vpop.f32.mrf.mxu0
    %v1127 = vadd.f32 0.0, %v1126
    %1128 = vmatmul.f32.gmra.mxu0 %v1107
    %v1129 = vpop.f32.mrf.mxu0
    %v1130 = vadd.f32 0.0, %v1129
    %1131 = vdwg.mxu0
    %1132 = vrot.lane.b32.xlu0 %v938, 112
    %v1133 = vpop.permute.xlu0 %1132
    %1134 = vrot.lane.b32.xlu0 %v939, 112
    %v1135 = vpop.permute.xlu0 %1134
    %1136 = vrot.lane.b32.xlu0 %v903, 80
    %v1137 = vpop.permute.xlu0 %1136
    %1138 = vrot.lane.b32.xlu0 %v906, 80
    %v1139 = vpop.permute.xlu0 %1138
    %v1140 = vsel %vm218, %v1133, 0
    %v1142 = vsel %vm218, %v1135, 0
    %v1144 = vsel %vm218, %v1137, 0
    %v1146 = vsel %vm218, %v1139, 0
    %1148 = vmatpush.xpose.msra.mxu0 0.0
    %1149 = vmatpush.xpose.msra.mxu0 0.0
    %1150 = vmatpush.xpose.msra.mxu0 0.0
    %1151 = vmatpush.xpose.msra.mxu0 0.0
    %1152 = vmatpush.xpose.msra.mxu0 0.0
    %1153 = vmatpush.xpose.msra.mxu0 0.0
    %1154 = vmatpush.xpose.msra.mxu0 0.0
    %1155 = vmatpush.xpose.msra.mxu0 0.0
    %1156 = vmatpush.xpose.msra.mxu0 0.0
    %1157 = vmatpush.xpose.msra.mxu0 0.0
    %1158 = vmatpush.xpose.msra.mxu0 0.0
    %1159 = vmatpush.xpose.msra.mxu0 0.0
    %1160 = vmatpush.xpose.msra.mxu0 0.0
    %1161 = vmatpush.xpose.msra.mxu0 0.0
    %1162 = vmatpush.xpose.msra.mxu0 %v1146
    %1163 = vmatpush.xpose.msra.mxu0 %v1144
    %1164 = vmatmul.f32.gmra.mxu0 %v1140
    %v1165 = vpop.f32.mrf.mxu0
    %v1166 = vadd.f32 0.0, %v1165
    %1167 = vmatmul.f32.gmra.mxu0 %v1142
    %v1168 = vpop.f32.mrf.mxu0
    %v1169 = vadd.f32 0.0, %v1168
    %1170 = vdwg.mxu0
    %v1171 = vsel %vm116, %v1166, -1e+30
    %v1172 = vsel %vm117, %v1169, -1e+30
    %v1173 = vsel %vm254, %v1171, -inf
    %1174 = vmax.xlane.f32.xlu0 %v1173
    %v1175 = vpop.xlane.xlu0 %1174
    %v1176 = vsel %vm254, %v1172, -inf
    %1177 = vmax.xlane.f32.xlu0 %v1176
    %v1178 = vpop.xlane.xlu0 %1177
    %v1179 = vsub.f32 %v1171, %v1175
    %v1180 = vsub.f32 %v1172, %v1178
    %v1181 = vmul.f32 %v1179, 1.442695
    %v1182 = vpow.pop %v1181
    %v1183 = vmul.f32 %v1180, 1.442695
    %v1184 = vpow.pop %v1183
    %v1185 = vsel %vm254, %v1182, 0.0
    %1186 = vadd.xlane.f32.xlu0 %v1185
    %v1187 = vpop.xlane.xlu0 %1186
    %v1188 = vsel %vm254, %v1184, 0.0
    %1189 = vadd.xlane.f32.xlu0 %v1188
    %v1190 = vpop.xlane.xlu0 %1189
    %v1191 = vrcp.pop %v1187
    %v1192 = vrcp.pop %v1190
    %v1193 = vmul.f32 %v1182, %v1191
    %v1194 = vmul.f32 %v1184, %v1192
    %1195 = vrot.lane.b32.xlu0 %v933, 112
    %v1196 = vpop.permute.xlu0 %1195
    %1197 = vrot.lane.b32.xlu0 %v936, 112
    %v1198 = vpop.permute.xlu0 %1197
    %v1202 = vsel %vm254, %v1193, 0
    %v1205 = vsel %vm254, %v1194, 0
    %1207 = vmatpush.msra.mxu0 0.0
    %1208 = vmatpush.msra.mxu0 0.0
    %1209 = vmatpush.msra.mxu0 0.0
    %1210 = vmatpush.msra.mxu0 0.0
    %1211 = vmatpush.msra.mxu0 0.0
    %1212 = vmatpush.msra.mxu0 0.0
    %1213 = vmatpush.msra.mxu0 0.0
    %1214 = vmatpush.msra.mxu0 0.0
    %1215 = vmatpush.msra.mxu0 0.0
    %1216 = vmatpush.msra.mxu0 0.0
    %1217 = vmatpush.msra.mxu0 0.0
    %1218 = vmatpush.msra.mxu0 0.0
    %1219 = vmatpush.msra.mxu0 0.0
    %1220 = vmatpush.msra.mxu0 0.0
    %1221 = vmatpush.msra.mxu0 %v1198
    %1222 = vmatpush.msra.mxu0 %v1196
    %1223 = vmatmul.f32.gmra.mxu0 %v1202
    %v1224 = vpop.f32.mrf.mxu0
    %v1225 = vadd.f32 0.0, %v1224
    %1226 = vmatmul.f32.gmra.mxu0 %v1205
    %v1227 = vpop.f32.mrf.mxu0
    %v1228 = vadd.f32 0.0, %v1227
    %1229 = vdwg.mxu0
    %1230 = vrot.lane.b32.xlu0 %v938, 104
    %v1231 = vpop.permute.xlu0 %1230
    %1232 = vrot.lane.b32.xlu0 %v939, 104
    %v1233 = vpop.permute.xlu0 %1232
    %1234 = vrot.lane.b32.xlu0 %v903, 72
    %v1235 = vpop.permute.xlu0 %1234
    %1236 = vrot.lane.b32.xlu0 %v906, 72
    %v1237 = vpop.permute.xlu0 %1236
    %v1238 = vsel %vm218, %v1231, 0
    %v1240 = vsel %vm218, %v1233, 0
    %v1242 = vsel %vm218, %v1235, 0
    %v1244 = vsel %vm218, %v1237, 0
    %1246 = vmatpush.xpose.msra.mxu0 0.0
    %1247 = vmatpush.xpose.msra.mxu0 0.0
    %1248 = vmatpush.xpose.msra.mxu0 0.0
    %1249 = vmatpush.xpose.msra.mxu0 0.0
    %1250 = vmatpush.xpose.msra.mxu0 0.0
    %1251 = vmatpush.xpose.msra.mxu0 0.0
    %1252 = vmatpush.xpose.msra.mxu0 0.0
    %1253 = vmatpush.xpose.msra.mxu0 0.0
    %1254 = vmatpush.xpose.msra.mxu0 0.0
    %1255 = vmatpush.xpose.msra.mxu0 0.0
    %1256 = vmatpush.xpose.msra.mxu0 0.0
    %1257 = vmatpush.xpose.msra.mxu0 0.0
    %1258 = vmatpush.xpose.msra.mxu0 0.0
    %1259 = vmatpush.xpose.msra.mxu0 0.0
    %1260 = vmatpush.xpose.msra.mxu0 %v1244
    %1261 = vmatpush.xpose.msra.mxu0 %v1242
    %1262 = vmatmul.f32.gmra.mxu0 %v1238
    %v1263 = vpop.f32.mrf.mxu0
    %v1264 = vadd.f32 0.0, %v1263
    %1265 = vmatmul.f32.gmra.mxu0 %v1240
    %v1266 = vpop.f32.mrf.mxu0
    %v1267 = vadd.f32 0.0, %v1266
    %1268 = vdwg.mxu0
    %v1269 = vsel %vm116, %v1264, -1e+30
    %v1270 = vsel %vm117, %v1267, -1e+30
    %v1271 = vsel %vm254, %v1269, -inf
    %1272 = vmax.xlane.f32.xlu0 %v1271
    %v1273 = vpop.xlane.xlu0 %1272
    %v1274 = vsel %vm254, %v1270, -inf
    %1275 = vmax.xlane.f32.xlu0 %v1274
    %v1276 = vpop.xlane.xlu0 %1275
    %v1277 = vsub.f32 %v1269, %v1273
    %v1278 = vsub.f32 %v1270, %v1276
    %v1279 = vmul.f32 %v1277, 1.442695
    %v1280 = vpow.pop %v1279
    %v1281 = vmul.f32 %v1278, 1.442695
    %v1282 = vpow.pop %v1281
    %v1283 = vsel %vm254, %v1280, 0.0
    %1284 = vadd.xlane.f32.xlu0 %v1283
    %v1285 = vpop.xlane.xlu0 %1284
    %v1286 = vsel %vm254, %v1282, 0.0
    %1287 = vadd.xlane.f32.xlu0 %v1286
    %v1288 = vpop.xlane.xlu0 %1287
    %v1289 = vrcp.pop %v1285
    %v1290 = vrcp.pop %v1288
    %v1291 = vmul.f32 %v1280, %v1289
    %v1292 = vmul.f32 %v1282, %v1290
    %1293 = vrot.lane.b32.xlu0 %v933, 104
    %v1294 = vpop.permute.xlu0 %1293
    %1295 = vrot.lane.b32.xlu0 %v936, 104
    %v1296 = vpop.permute.xlu0 %1295
    %v1300 = vsel %vm254, %v1291, 0
    %v1303 = vsel %vm254, %v1292, 0
    %1305 = vmatpush.msra.mxu0 0.0
    %1306 = vmatpush.msra.mxu0 0.0
    %1307 = vmatpush.msra.mxu0 0.0
    %1308 = vmatpush.msra.mxu0 0.0
    %1309 = vmatpush.msra.mxu0 0.0
    %1310 = vmatpush.msra.mxu0 0.0
    %1311 = vmatpush.msra.mxu0 0.0
    %1312 = vmatpush.msra.mxu0 0.0
    %1313 = vmatpush.msra.mxu0 0.0
    %1314 = vmatpush.msra.mxu0 0.0
    %1315 = vmatpush.msra.mxu0 0.0
    %1316 = vmatpush.msra.mxu0 0.0
    %1317 = vmatpush.msra.mxu0 0.0
    %1318 = vmatpush.msra.mxu0 0.0
    %1319 = vmatpush.msra.mxu0 %v1296
    %1320 = vmatpush.msra.mxu0 %v1294
    %1321 = vmatmul.f32.gmra.mxu0 %v1300
    %v1322 = vpop.f32.mrf.mxu0
    %v1323 = vadd.f32 0.0, %v1322
    %1324 = vmatmul.f32.gmra.mxu0 %v1303
    %v1325 = vpop.f32.mrf.mxu0
    %v1326 = vadd.f32 0.0, %v1325
    %1327 = vdwg.mxu0
    %1330 = vrot.lane.b32.xlu0 %v1127, 8
    %v1331 = vpop.permute.xlu0 %1330
    %1332 = vrot.lane.b32.xlu0 %v1130, 8
    %v1333 = vpop.permute.xlu0 %1332
    %1338 = vrot.lane.b32.xlu0 %v1225, 16
    %v1339 = vpop.permute.xlu0 %1338
    %1340 = vrot.lane.b32.xlu0 %v1228, 16
    %v1341 = vpop.permute.xlu0 %1340
    %1346 = vrot.lane.b32.xlu0 %v1323, 24
    %v1347 = vpop.permute.xlu0 %1346
    %1348 = vrot.lane.b32.xlu0 %v1326, 24
    %v1349 = vpop.permute.xlu0 %1348
    %v1352 = vsel %vm218, %v1027, %v1331
    %v1353 = vsel %vm218, %v1030, %v1333
    %v1354 = vsel %vm254, %v1352, %v1339
    %v1355 = vsel %vm254, %v1353, %v1341
    %v1356 = vsel %vm630, %v1354, %v1347
    %v1357 = vsel %vm630, %v1355, %v1349
    %v1358 = vperm.slane %v873, 1
    %v1360 = vsel %vm150, %v1356, 0
    %v1363 = vsel %vm150, %v1357, 0
    %1365 = vmatpush.msra.mxu0 0.0
    %1366 = vmatpush.msra.mxu0 0.0
    %1367 = vmatpush.msra.mxu0 0.0
    %1368 = vmatpush.msra.mxu0 0.0
    %1369 = vmatpush.msra.mxu0 0.0
    %1370 = vmatpush.msra.mxu0 0.0
    %1371 = vmatpush.msra.mxu0 0.0
    %1372 = vmatpush.msra.mxu0 0.0
    %1373 = vmatpush.msra.mxu0 0.0
    %1374 = vmatpush.msra.mxu0 0.0
    %1375 = vmatpush.msra.mxu0 0.0
    %1376 = vmatpush.msra.mxu0 0.0
    %1377 = vmatpush.msra.mxu0 %v853
    %1378 = vmatpush.msra.mxu0 %v852
    %1379 = vmatpush.msra.mxu0 %v851
    %1380 = vmatpush.msra.mxu0 %v850
    %1381 = vmatmul.f32.gmra.mxu0 %v1360
    %v1382 = vpop.f32.mrf.mxu0
    %v1383 = vadd.f32 %v1358, %v1382
    %1384 = vmatmul.f32.gmra.mxu0 %v1363
    %v1385 = vpop.f32.mrf.mxu0
    %v1386 = vadd.f32 %v1358, %v1385
    %1387 = vdwg.mxu0
    %v1388 = vadd.f32 %v837, %v1383
    %v1389 = vadd.f32 %v838, %v1386
    %v1390 = vsel %vm150, %v1388, 0.0
    %1391 = vadd.xlane.f32.xlu0 %v1390
    %v1392 = vpop.xlane.xlu0 %1391
    %v1393 = vsel %vm150, %v1389, 0.0
    %1394 = vadd.xlane.f32.xlu0 %v1393
    %v1395 = vpop.xlane.xlu0 %1394
    %v1396 = vmul.f32 %v1392, %v677
    %v1397 = vmul.f32 %v1395, %v677
    %v1398 = vsub.f32 %v1388, %v1396
    %v1399 = vsub.f32 %v1389, %v1397
    %v1400 = vmul.f32 %v1398, %v1398
    %v1401 = vmul.f32 %v1399, %v1399
    %v1402 = vsel %vm150, %v1400, 0.0
    %1403 = vadd.xlane.f32.xlu0 %v1402
    %v1404 = vpop.xlane.xlu0 %1403
    %v1405 = vsel %vm150, %v1401, 0.0
    %1406 = vadd.xlane.f32.xlu0 %v1405
    %v1407 = vpop.xlane.xlu0 %1406
    %v1408 = vmul.f32 %v1404, %v677
    %v1409 = vmul.f32 %v1407, %v677
    %v1410 = vadd.f32 %v1408, 1e-05
    %v1411 = vadd.f32 %v1409, 1e-05
    %v1412 = vrsqrt.pop %v1410
    %v1413 = vmul.f32 %v1412, %v1410
    %v1414 = vmul.f32 %v1413, %v1412
    %v1415 = vmul.f32 0.5, %v1414
    %v1416 = vsub.f32 1.5, %v1415
    %v1417 = vmul.f32 %v1412, %v1416
    %vm1418 = vweird.f32 %v1410
    %vm1419 = vweird.f32 %v1412
    %vm1420 = vmor %vm1418, %vm1419
    %v1421 = vsel %vm1420, %v1412, %v1417
    %v1422 = vrsqrt.pop %v1411
    %v1423 = vmul.f32 %v1422, %v1411
    %v1424 = vmul.f32 %v1423, %v1422
    %v1425 = vmul.f32 0.5, %v1424
    %v1426 = vsub.f32 1.5, %v1425
    %v1427 = vmul.f32 %v1422, %v1426
    %vm1428 = vweird.f32 %v1411
    %vm1429 = vweird.f32 %v1422
    %vm1430 = vmor %vm1428, %vm1429
    %v1431 = vsel %vm1430, %v1422, %v1427
    %v1432 = vmul.f32 %v1398, %v1421
    %v1433 = vmul.f32 %v1399, %v1431
    %v1434 = vperm.slane %v873, 3
    %v1435 = vmul.f32 %v1432, %v1434
    %v1436 = vmul.f32 %v1433, %v1434
    %v1437 = vperm.slane %v873, 4
    %v1438 = vadd.f32 %v1435, %v1437
    %v1439 = vadd.f32 %v1436, %v1437
    %v1441 = vperm.slane %v871, 0
    %v1444 = vsel %vm150, %v1438, 0
    %v1447 = vsel %vm150, %v1439, 0
    %1449 = vmatpush.msra.mxu0 0.0
    %1450 = vmatpush.msra.mxu0 0.0
    %1451 = vmatpush.msra.mxu0 0.0
    %1452 = vmatpush.msra.mxu0 0.0
    %1453 = vmatpush.msra.mxu0 0.0
    %1454 = vmatpush.msra.mxu0 0.0
    %1455 = vmatpush.msra.mxu0 0.0
    %1456 = vmatpush.msra.mxu0 0.0
    %1457 = vmatpush.msra.mxu0 0.0
    %1458 = vmatpush.msra.mxu0 0.0
    %1459 = vmatpush.msra.mxu0 0.0
    %1460 = vmatpush.msra.mxu0 0.0
    %1461 = vmatpush.msra.mxu0 %v858
    %1462 = vmatpush.msra.mxu0 %v857
    %1463 = vmatpush.msra.mxu0 %v856
    %1464 = vmatpush.msra.mxu0 %v855
    %1465 = vmatmul.f32.gmra.mxu0 %v1444
    %v1466 = vpop.f32.mrf.mxu0
    %v1467 = vadd.f32 %v1441, %v1466
    %1468 = vmatmul.f32.gmra.mxu0 %v1447
    %v1469 = vpop.f32.mrf.mxu0
    %v1470 = vadd.f32 %v1441, %v1469
    %1471 = vdwg.mxu0
    %v1472 = vmax.f32 %v1467, 0.0
    %v1473 = vmax.f32 %v1470, 0.0
    %v1474 = vperm.slane %v873, 2
    %v1476 = vsel %vm757, %v1472, 0
    %v1479 = vsel %vm757, %v1473, 0
    %1481 = vmatpush.msra.mxu0 0.0
    %1482 = vmatpush.msra.mxu0 0.0
    %1483 = vmatpush.msra.mxu0 0.0
    %1484 = vmatpush.msra.mxu0 0.0
    %1485 = vmatpush.msra.mxu0 0.0
    %1486 = vmatpush.msra.mxu0 0.0
    %1487 = vmatpush.msra.mxu0 0.0
    %1488 = vmatpush.msra.mxu0 0.0
    %1489 = vmatpush.msra.mxu0 %v867
    %1490 = vmatpush.msra.mxu0 %v866
    %1491 = vmatpush.msra.mxu0 %v865
    %1492 = vmatpush.msra.mxu0 %v864
    %1493 = vmatpush.msra.mxu0 %v863
    %1494 = vmatpush.msra.mxu0 %v862
    %1495 = vmatpush.msra.mxu0 %v861
    %1496 = vmatpush.msra.mxu0 %v860
    %1497 = vmatmul.f32.gmra.mxu0 %v1476
    %v1498 = vpop.f32.mrf.mxu0
    %v1499 = vadd.f32 %v1474, %v1498
    %1500 = vmatmul.f32.gmra.mxu0 %v1479
    %v1501 = vpop.f32.mrf.mxu0
    %v1502 = vadd.f32 %v1474, %v1501
    %1503 = vdwg.mxu0
    %v1504 = vadd.f32 %v1438, %v1499
    %v1505 = vadd.f32 %v1439, %v1502
    %v1506 = vsel %vm150, %v1504, 0.0
    %1507 = vadd.xlane.f32.xlu0 %v1506
    %v1508 = vpop.xlane.xlu0 %1507
    %v1509 = vsel %vm150, %v1505, 0.0
    %1510 = vadd.xlane.f32.xlu0 %v1509
    %v1511 = vpop.xlane.xlu0 %1510
    %v1512 = vmul.f32 %v1508, %v677
    %v1513 = vmul.f32 %v1511, %v677
    %v1514 = vsub.f32 %v1504, %v1512
    %v1515 = vsub.f32 %v1505, %v1513
    %v1516 = vmul.f32 %v1514, %v1514
    %v1517 = vmul.f32 %v1515, %v1515
    %v1518 = vsel %vm150, %v1516, 0.0
    %1519 = vadd.xlane.f32.xlu0 %v1518
    %v1520 = vpop.xlane.xlu0 %1519
    %v1521 = vsel %vm150, %v1517, 0.0
    %1522 = vadd.xlane.f32.xlu0 %v1521
    %v1523 = vpop.xlane.xlu0 %1522
    %v1524 = vmul.f32 %v1520, %v677
    %v1525 = vmul.f32 %v1523, %v677
    %v1526 = vadd.f32 %v1524, 1e-05
    %v1527 = vadd.f32 %v1525, 1e-05
    %v1528 = vrsqrt.pop %v1526
    %v1529 = vmul.f32 %v1528, %v1526
    %v1530 = vmul.f32 %v1529, %v1528
    %v1531 = vmul.f32 0.5, %v1530
    %v1532 = vsub.f32 1.5, %v1531
    %v1533 = vmul.f32 %v1528, %v1532
    %vm1534 = vweird.f32 %v1526
    %vm1535 = vweird.f32 %v1528
    %vm1536 = vmor %vm1534, %vm1535
    %v1537 = vsel %vm1536, %v1528, %v1533
    %v1538 = vrsqrt.pop %v1527
    %v1539 = vmul.f32 %v1538, %v1527
    %v1540 = vmul.f32 %v1539, %v1538
    %v1541 = vmul.f32 0.5, %v1540
    %v1542 = vsub.f32 1.5, %v1541
    %v1543 = vmul.f32 %v1538, %v1542
    %vm1544 = vweird.f32 %v1527
    %vm1545 = vweird.f32 %v1538
    %vm1546 = vmor %vm1544, %vm1545
    %v1547 = vsel %vm1546, %v1538, %v1543
    %v1548 = vmul.f32 %v1514, %v1537
    %v1549 = vmul.f32 %v1515, %v1547
    %v1550 = vperm.slane %v873, 5
    %v1551 = vmul.f32 %v1548, %v1550
    %v1552 = vmul.f32 %v1549, %v1550
    %v1553 = vperm.slane %v873, 6
    %v1554 = vadd.f32 %v1551, %v1553
    %v1555 = vadd.f32 %v1552, %v1553
    %v1556 = vld [vmem:[%s10] sm:$0x3]
    %v1557 = vsel %vm150, %v1554, 0.0
    %1558 = vadd.xlane.f32.xlu0 %v1557
    %v1559 = vpop.xlane.xlu0 %1558
    %v1560 = vsel %vm150, %v1555, 0.0
    %1561 = vadd.xlane.f32.xlu0 %v1560
    %v1562 = vpop.xlane.xlu0 %1561
    %v1563 = vmul.f32 %v1559, %v677
    %v1564 = vmul.f32 %v1562, %v677
    %v1565 = vsub.f32 %v1554, %v1563
    %v1566 = vsub.f32 %v1555, %v1564
    %v1567 = vmul.f32 %v1565, %v1565
    %v1568 = vmul.f32 %v1566, %v1566
    %v1569 = vsel %vm150, %v1567, 0.0
    %1570 = vadd.xlane.f32.xlu0 %v1569
    %v1571 = vpop.xlane.xlu0 %1570
    %v1572 = vsel %vm150, %v1568, 0.0
    %1573 = vadd.xlane.f32.xlu0 %v1572
    %v1574 = vpop.xlane.xlu0 %1573
    %v1575 = vmul.f32 %v1571, %v677
    %v1576 = vmul.f32 %v1574, %v677
    %v1577 = vadd.f32 %v1575, 1e-05
    %v1578 = vadd.f32 %v1576, 1e-05
    %v1579 = vrsqrt.pop %v1577
    %v1580 = vmul.f32 %v1579, %v1577
    %v1581 = vmul.f32 %v1580, %v1579
    %v1582 = vmul.f32 0.5, %v1581
    %v1583 = vsub.f32 1.5, %v1582
    %v1584 = vmul.f32 %v1579, %v1583
    %vm1585 = vweird.f32 %v1577
    %vm1586 = vweird.f32 %v1579
    %vm1587 = vmor %vm1585, %vm1586
    %v1588 = vsel %vm1587, %v1579, %v1584
    %v1589 = vrsqrt.pop %v1578
    %v1590 = vmul.f32 %v1589, %v1578
    %v1591 = vmul.f32 %v1590, %v1589
    %v1592 = vmul.f32 0.5, %v1591
    %v1593 = vsub.f32 1.5, %v1592
    %v1594 = vmul.f32 %v1589, %v1593
    %vm1595 = vweird.f32 %v1578
    %vm1596 = vweird.f32 %v1589
    %vm1597 = vmor %vm1595, %vm1596
    %v1598 = vsel %vm1597, %v1589, %v1594
    %v1599 = vmul.f32 %v1565, %v1588
    %v1600 = vmul.f32 %v1566, %v1598
    %v1601 = vperm.slane %v1556, 0
    %v1602 = vmul.f32 %v1599, %v1601
    %v1603 = vmul.f32 %v1600, %v1601
    %v1604 = vperm.slane %v1556, 1
    %v1605 = vadd.f32 %v1602, %v1604
    %v1606 = vadd.f32 %v1603, %v1604
    %1607 = vst.msk [vmem:[#allocation7] sm:$0xff] %vm150, %v1605
    %1608 = vst.msk [vmem:[#allocation7 + $0x8] sm:$0xff] %vm150, %v1606
    // Predicated region
    $region54: #{tpu_custom_call.1} parent=1 // pred_check
      _
    $region55: #{tpu_custom_call.1} parent=1 // pred_check_branch
      %1610 = sbr.rel (0) target = $region57
    $region56: #{tpu_custom_call.1} parent=1 // pred_region
      %1612 = vsyncadd [#allocation4], 0
      %s1613 = sshll.u32 [#allocation7], 4
      %s1614 = int_to_ptr.vmem [resolvable:$true] %s1613
      %s1615 = sshll.u32 %s11, 4
      %s1616 = int_to_ptr.hbm [resolvable:$true] %s1615
      %1621 = dma.vmem_to_hbm [thread:$0]  %s1614, 256, %s1616, [#allocation4], 128, 128, 8
    $region57: #{tpu_custom_call.1} parent=1 // pred_fallthru
      _
    // Predicated region
    $region58: #{tpu_custom_call.1} parent=1 // pred_check
      _
    $region59: #{tpu_custom_call.1} parent=1 // pred_check_branch
      %1623 = sbr.rel (0) target = $region61
    $region60: #{tpu_custom_call.1} parent=1 // pred_region
      %1625 = dma.done [#allocation4], 256
    $region61: #{tpu_custom_call.1} parent=1 // pred_fallthru
      _
    %1626 = vsyncpa [#allocation3], 1
    %1627 = vsyncpa [#allocation6], 1
    %1628 = vsyncpa [#allocation4], 1

</llo_original>
